<compile_context>
chip_gen: v7x
topology: tpu7x:2x2x1
jax: 0.10.0
libtpu: 0.0.40
codegen_flags: <defaults>
</compile_context>

<pallas_src>
import functools

import jax
import jax.numpy as jnp
from jax import lax
from jax.experimental import pallas as pl
from jax.experimental.pallas import tpu as pltpu


def _round_up(v, m):
    return (v + m - 1) // m * m


# ----------------------------------------------------------------------------
# Pallas kernel: the full implicit-module fixed-point iteration, VMEM-resident.
# ----------------------------------------------------------------------------
def gind_implicit_kernel(rows_ref, cols_ref, cu_ref, wt_ref, ww_ref, nf2_ref,
                         out_ref, *, num_layers, total_num, alpha, hidden,
                         num_edge_tiles, ln_eps=1e-5):
    n_pad, h_pad = out_ref.shape

    # Small [Hp,Hp] weights stay hoisted (cheap to keep live); the large
    # cu slab / nf^2 column are re-read from their VMEM refs per use.
    wts = [wt_ref[l] for l in range(num_layers)]     # bf16 [Hp,Hp]  W.weight.T
    wws = [ww_ref[l] for l in range(num_layers)]     # bf16 [Hp,Hp]  W.weight

    # Column iota only; lane broadcast inside the compares is free on the VPU.
    node_col = lax.broadcasted_iota(jnp.int32, (n_pad, 1), 0)
    inv_h = 1.0 / float(hidden)
    if h_pad != hidden:                              # mask padded hidden lanes
        hmask = (lax.broadcasted_iota(jnp.int32, (1, h_pad), 1) < hidden
                 ).astype(jnp.float32)
    else:
        hmask = None

    def one_layer(zt, l):
        # mn = norm_factor * (W(z) + degree*U(x))  in zt coordinates.
        mn = jnp.dot(zt.astype(jnp.bfloat16), wts[l],
                     preferred_element_type=jnp.float32) + cu_ref[l]   # [Np,Hp]
        mn_b = mn.astype(jnp.bfloat16)

        def edge_tile_body(t, spre):
            r = rows_ref[pl.ds(t, 1), :]                               # [1,Et] i32
            c = cols_ref[pl.ds(t, 1), :]
            # Signed incidence block built on the fly, directly in bf16:
            # bt[n,e] = 1[n==row_e] - 1[n==col_e].  Padded edges (row=col=0)
            # give an all-zero column -> no contribution.
            bt = ((node_col == r).astype(jnp.bfloat16)
                  - (node_col == c).astype(jnp.bfloat16))              # [Np,Et]
            # Gather: eh = mn[row] - mn[col] == bt^T @ mn (contract node axis).
            eh = lax.dot_general(bt, mn_b, (((0,), (0,)), ((), ())),
                                 preferred_element_type=jnp.float32)   # [Et,Hp]
            eh = jnp.tanh(eh)                                          # act_imp
            # One-pass LayerNorm over the real hidden dim (gamma=1, beta=0).
            mu = jnp.sum(eh, axis=-1, keepdims=True) * inv_h
            ms = jnp.sum(eh * eh, axis=-1, keepdims=True) * inv_h
            var = jnp.maximum(ms - mu * mu, 0.0)
            eh = (eh - mu) * lax.rsqrt(var + ln_eps)
            if hmask is not None:
                eh = eh * hmask
            # Scatter-add(+row) / scatter-sub(-col): spre += bt @ eh.
            return spre + jnp.dot(bt, eh.astype(jnp.bfloat16),
                                  preferred_element_type=jnp.float32)  # [Np,Hp]

        spre0 = jnp.zeros((n_pad, h_pad), jnp.float32)
        if num_edge_tiles == 1:
            spre = edge_tile_body(0, spre0)
        else:
            # unroll=2: overlap tile t+1's VPU incidence build with tile t's
            # MXU gather/scatter matmuls.
            spre = lax.fori_loop(0, num_edge_tiles, edge_tile_body, spre0,
                                 unroll=2)
        # new_z = -(nf^2 * spre) @ W.weight ; fused relaxation in zt coordinates.
        upd = jnp.dot((nf2_ref[...] * spre).astype(jnp.bfloat16), wws[l],
                      preferred_element_type=jnp.float32)
        return zt - alpha * (zt + upd)

    def fp_step(_, zt):
        for l in range(num_layers):
            zt = one_layer(zt, l)
        return zt

    zt = lax.fori_loop(0, total_num, fp_step,
                       jnp.zeros((n_pad, h_pad), jnp.float32))
    out_ref[...] = zt


# ----------------------------------------------------------------------------
# JAX wrapper (cal_norm, extractor, per-layer constants, padding, output head)
# ----------------------------------------------------------------------------
def gind_forward(x, edge_index, params, *, total_num, alpha, edge_tile=None):
    N = x.shape[0]
    H = params["W_ext"].shape[0]
    L = len(params["W_imp"])

    row = edge_index[0].astype(jnp.int32)
    col = edge_index[1].astype(jnp.int32)
    E = int(row.shape[0])

    # cal_norm(edge_index, self_loop=True): D = out-degree + 1, nf = (2D)^{-1/2}
    deg_count = jnp.zeros((N,), jnp.float32).at[row].add(1.0) + 1.0
    nf = 1.0 / jnp.sqrt(2.0 * deg_count)                       # [N]  (> 0)

    # extractor: x -> hidden
    xh = x @ params["W_ext"].T + params["b_ext"]               # [N,H]

    # Lane/sublane-friendly padded sizes.  Nodes rounded to 16 so the bf16
    # node axis (sublane dim of bt / mn_b / zt) packs into full vregs.
    h_pad = _round_up(H, 128)
    n_pad = _round_up(N, 16)

    # Generation-aware VMEM budget + edge-tile pick.
    try:
        vmem_cap = int(pltpu.get_tpu_info().vmem_capacity_bytes)
    except Exception:
        vmem_cap = 64 * 1024 * 1024
    vmem_limit = int(min(max(vmem_cap - (16 << 20), 32 << 20), 112 << 20))
    if edge_tile is None:
        tile_cap = 256 if vmem_cap <= (64 << 20) else 512
        budget = 8 << 20           # transient budget for 2 unrolled bf16 bt tiles
        edge_tile = max(128, min(tile_cap, (budget // (4 * n_pad)) // 128 * 128))
    e_tile = edge_tile if E >= edge_tile else _round_up(max(E, 1), 128)
    n_tiles = -(-E // e_tile)
    e_pad = n_tiles * e_tile

    # Per-layer constant c_l = U_l(x)+b_l (nf*degree == 1 under rescale=True).
    cu = jnp.stack([xh @ u.T + b
                    for u, b in zip(params["U_imp"], params["bU_imp"])])   # [L,N,H]
    cu = jnp.pad(cu, ((0, 0), (0, n_pad - N), (0, h_pad - H)))

    # bf16 weight stacks (zero-padded so padded lanes stay exactly zero).
    wt = jnp.pad(jnp.stack([w.T for w in params["W_imp"]]),
                 ((0, 0), (0, h_pad - H), (0, h_pad - H))).astype(jnp.bfloat16)
    ww = jnp.pad(jnp.stack(params["W_imp"]),
                 ((0, 0), (0, h_pad - H), (0, h_pad - H))).astype(jnp.bfloat16)

    # nf^2 as a [Np, 1] column; the lane broadcast inside the kernel is free.
    nf2 = jnp.pad(nf * nf, (0, n_pad - N)).reshape(n_pad, 1).astype(jnp.float32)

    # Edge indices as lane-dense int32 tiles; padded edges use row=col=0.
    rows = jnp.pad(row, (0, e_pad - E)).reshape(n_tiles, e_tile)
    cols = jnp.pad(col, (0, e_pad - E)).reshape(n_tiles, e_tile)

    kernel = functools.partial(
        gind_implicit_kernel, num_layers=L, total_num=total_num,
        alpha=float(alpha), hidden=H, num_edge_tiles=n_tiles)

    # Single invocation (no grid): memory-space-only specs => single-buffered,
    # whole arrays resident in VMEM exactly once.
    vspec = pl.BlockSpec(memory_space=pltpu.MemorySpace.VMEM)

    # TODO(synk): node-axis tiling (CSR edge bucketing) and a v7x dual-TensorCore
    # edge split with a VMEM_SHARED spre reduction would remove the O(N) factor
    # from the incidence matmuls; left out of this single-core VMEM-resident
    # version.  For graphs where cu does not fit VMEM, stream cu from HBM
    # (memory_space=pl.ANY + make_async_copy double buffer).
    zt = pl.pallas_call(
        kernel,
        out_shape=jax.ShapeDtypeStruct((n_pad, h_pad), jnp.float32),
        in_specs=[vspec] * 6,
        out_specs=vspec,
        compiler_params=pltpu.CompilerParams(vmem_limit_bytes=vmem_limit),
    )(rows, cols, cu, wt, ww, nf2)

    # TODO(synk): Append_func / regularize autograd branch omitted — default
    # config (reg_type='', reg_coeff=0.0) makes it the identity.

    # Residual with rescale=True: z_out = norm_factor*new_z + x_hidden == zt + xh.
    z_out = zt[:N, :H] + xh
    # last_layer: linear=True -> single Linear, no activation.
    pred = z_out @ params["W_out"].T + params["b_out"]
    return pred


# ----------------------------------------------------------------------------
# Deterministic parameter init (mimics kaiming_normal / xavier_normal shapes)
# ----------------------------------------------------------------------------
def init_params(key, in_channels, hidden, out_channels, num_layers):
    keys = jax.random.split(key, 3 + 2 * num_layers)

    def kaiming(k, shape):      # fan_in = shape[1], gain=sqrt(2)
        return jax.random.normal(k, shape, jnp.float32) * jnp.sqrt(2.0 / shape[1])

    def xavier(k, shape):
        return jax.random.normal(k, shape, jnp.float32) * jnp.sqrt(2.0 / (shape[0] + shape[1]))

    params = {
        "W_ext": kaiming(keys[0], (hidden, in_channels)),
        "b_ext": jnp.zeros((hidden,), jnp.float32),
        "W_imp": [kaiming(keys[1 + i], (hidden, hidden)) for i in range(num_layers)],
        "U_imp": [kaiming(keys[1 + num_layers + i], (hidden, hidden)) for i in range(num_layers)],
        "bU_imp": [jnp.zeros((hidden,), jnp.float32) for _ in range(num_layers)],
        "W_out": xavier(keys[-1], (out_channels, hidden)),
        "b_out": jnp.zeros((out_channels,), jnp.float32),
    }
    return params


if __name__ == "__main__":
    # Small deterministic example.
    N, C_IN, HIDDEN, C_OUT = 16, 8, 32, 4
    NUM_LAYERS = 2
    ALPHA = 0.5
    ITER_NUMS = (4, 2)            # (total, grad) -> total_num forward iterations = 4
    TOTAL_NUM = ITER_NUMS[0]

    key = jax.random.PRNGKey(0)
    k_x, k_p = jax.random.split(key)

    x = jax.random.normal(k_x, (N, C_IN), jnp.float32)

    # bidirectional ring graph: E = 2*N directed edges
    src = jnp.arange(N, dtype=jnp.int32)
    dst = (src + 1) % N
    edge_index = jnp.stack([jnp.concatenate([src, dst]),
                            jnp.concatenate([dst, src])])   # [2, 32]

    params = init_params(k_p, C_IN, HIDDEN, C_OUT, NUM_LAYERS)

    pred = gind_forward(x, edge_index, params, total_num=TOTAL_NUM, alpha=ALPHA)
    pred = jax.block_until_ready(pred)

    assert pred.shape == (N, C_OUT)
    assert bool(jnp.all(jnp.isfinite(pred)))
    print("KERNEL_OK")
</pallas_src>

<mosaic_0001>
module attributes {stable_mosaic.version = 11 : i64} {
  func.func @gind_implicit_kernel(%arg0: memref<1x128xi32, #tpu.memory_space<vmem>>, %arg1: memref<1x128xi32, #tpu.memory_space<vmem>>, %arg2: memref<2x16x128xf32, #tpu.memory_space<vmem>>, %arg3: memref<2x128x128xbf16, #tpu.memory_space<vmem>>, %arg4: memref<2x128x128xbf16, #tpu.memory_space<vmem>>, %arg5: memref<16x1xf32, #tpu.memory_space<vmem>>, %arg6: memref<16x128xf32, #tpu.memory_space<vmem>>) attributes {dimension_semantics = [], scalar_prefetch = 0 : i64, scratch_operands = 0 : i64, tpu.core_type = #tpu.core_type<tc>} {
    %c0 = arith.constant 0 : index
    %c0_0 = arith.constant 0 : index
    %c0_1 = arith.constant 0 : index
    %0 = vector.load %arg3[%c0, %c0_0, %c0_1] : memref<2x128x128xbf16, #tpu.memory_space<vmem>>, vector<1x128x128xbf16>
    %1 = vector.shape_cast %0 : vector<1x128x128xbf16> to vector<128x128xbf16>
    %c1 = arith.constant 1 : index
    %c0_2 = arith.constant 0 : index
    %c0_3 = arith.constant 0 : index
    %2 = vector.load %arg3[%c1, %c0_2, %c0_3] : memref<2x128x128xbf16, #tpu.memory_space<vmem>>, vector<1x128x128xbf16>
    %3 = vector.shape_cast %2 : vector<1x128x128xbf16> to vector<128x128xbf16>
    %c0_4 = arith.constant 0 : index
    %c0_5 = arith.constant 0 : index
    %c0_6 = arith.constant 0 : index
    %4 = vector.load %arg4[%c0_4, %c0_5, %c0_6] : memref<2x128x128xbf16, #tpu.memory_space<vmem>>, vector<1x128x128xbf16>
    %5 = vector.shape_cast %4 : vector<1x128x128xbf16> to vector<128x128xbf16>
    %c1_7 = arith.constant 1 : index
    %c0_8 = arith.constant 0 : index
    %c0_9 = arith.constant 0 : index
    %6 = vector.load %arg4[%c1_7, %c0_8, %c0_9] : memref<2x128x128xbf16, #tpu.memory_space<vmem>>, vector<1x128x128xbf16>
    %7 = vector.shape_cast %6 : vector<1x128x128xbf16> to vector<128x128xbf16>
    %8 = tpu.iota {dimensions = array<i32: 0>} : vector<16x1xi32>
    %9 = tpu.iota {dimensions = array<i32: 1>} : vector<1x128xi32>
    %c32_i32 = arith.constant 32 : i32
    %10 = vector.broadcast %c32_i32 : i32 to vector<1x128xi32>
    %11 = arith.cmpi slt, %9, %10 : vector<1x128xi32>
    %12 = arith.extui %11 : vector<1x128xi1> to vector<1x128xi32>
    %13 = arith.sitofp %12 : vector<1x128xi32> to vector<1x128xf32>
    %cst = arith.constant 0.000000e+00 : f32
    %14 = vector.broadcast %cst : f32 to vector<16x128xf32>
    %c0_i32 = arith.constant 0 : i32
    %c4_i32 = arith.constant 4 : i32
    %15 = arith.addi %c0_i32, %c4_i32 : i32
    %c1_i32 = arith.constant 1 : i32
    %16 = scf.for %arg7 = %c0_i32 to %15 step %c1_i32 iter_args(%arg8 = %14) -> (vector<16x128xf32>)  : i32 {
      %18 = arith.truncf %arg8 : vector<16x128xf32> to vector<16x128xbf16>
      %cst_12 = arith.constant dense<0.000000e+00> : vector<16x128xf32>
      %19 = tpu.matmul %18, %1, %cst_12 {dimension_numbers = #tpu.dot_dimension_numbers<[1], [0], [0], [1], [0, 0, 1, 1], [], []>} : vector<16x128xbf16>, vector<128x128xbf16>, vector<16x128xf32> -> vector<16x128xf32>
      %c0_13 = arith.constant 0 : index
      %c0_14 = arith.constant 0 : index
      %c0_15 = arith.constant 0 : index
      %20 = vector.load %arg2[%c0_13, %c0_14, %c0_15] : memref<2x16x128xf32, #tpu.memory_space<vmem>>, vector<1x16x128xf32>
      %21 = vector.shape_cast %20 : vector<1x16x128xf32> to vector<16x128xf32>
      %22 = arith.addf %19, %21 : vector<16x128xf32>
      %23 = arith.truncf %22 : vector<16x128xf32> to vector<16x128xbf16>
      %cst_16 = arith.constant 0.000000e+00 : f32
      %24 = vector.broadcast %cst_16 : f32 to vector<16x128xf32>
      %c0_17 = arith.constant 0 : index
      %c0_18 = arith.constant 0 : index
      %25 = vector.load %arg0[%c0_17, %c0_18] : memref<1x128xi32, #tpu.memory_space<vmem>>, vector<1x128xi32>
      %c0_19 = arith.constant 0 : index
      %c0_20 = arith.constant 0 : index
      %26 = vector.load %arg1[%c0_19, %c0_20] : memref<1x128xi32, #tpu.memory_space<vmem>>, vector<1x128xi32>
      %27 = vector.broadcast %8 : vector<16x1xi32> to vector<16x128xi32>
      %28 = vector.broadcast %25 : vector<1x128xi32> to vector<16x128xi32>
      %29 = arith.cmpi eq, %27, %28 : vector<16x128xi32>
      %30 = arith.extui %29 : vector<16x128xi1> to vector<16x128xi32>
      %31 = arith.sitofp %30 : vector<16x128xi32> to vector<16x128xf32>
      %32 = arith.truncf %31 : vector<16x128xf32> to vector<16x128xbf16>
      %33 = vector.broadcast %8 : vector<16x1xi32> to vector<16x128xi32>
      %34 = vector.broadcast %26 : vector<1x128xi32> to vector<16x128xi32>
      %35 = arith.cmpi eq, %33, %34 : vector<16x128xi32>
      %36 = arith.extui %35 : vector<16x128xi1> to vector<16x128xi32>
      %37 = arith.sitofp %36 : vector<16x128xi32> to vector<16x128xf32>
      %38 = arith.truncf %37 : vector<16x128xf32> to vector<16x128xbf16>
      %39 = arith.subf %32, %38 : vector<16x128xbf16>
      %cst_21 = arith.constant dense<0.000000e+00> : vector<128x128xf32>
      %40 = tpu.matmul %39, %23, %cst_21 {dimension_numbers = #tpu.dot_dimension_numbers<[0], [0], [1], [1], [0, 1, 1, 1], [], []>} : vector<16x128xbf16>, vector<16x128xbf16>, vector<128x128xf32> -> vector<128x128xf32>
      %41 = math.tanh %40 : vector<128x128xf32>
      %cst_22 = arith.constant dense<0.000000e+00> : vector<128xf32>
      %42 = vector.multi_reduction <add>, %41, %cst_22 [1] : vector<128x128xf32> to vector<128xf32>
      %43 = vector.shape_cast %42 : vector<128xf32> to vector<128x1xf32>
      %cst_23 = arith.constant 3.125000e-02 : f32
      %44 = vector.broadcast %cst_23 : f32 to vector<128x1xf32>
      %45 = arith.mulf %43, %44 : vector<128x1xf32>
      %46 = arith.mulf %41, %41 : vector<128x128xf32>
      %cst_24 = arith.constant dense<0.000000e+00> : vector<128xf32>
      %47 = vector.multi_reduction <add>, %46, %cst_24 [1] : vector<128x128xf32> to vector<128xf32>
      %48 = vector.shape_cast %47 : vector<128xf32> to vector<128x1xf32>
      %cst_25 = arith.constant 3.125000e-02 : f32
      %49 = vector.broadcast %cst_25 : f32 to vector<128x1xf32>
      %50 = arith.mulf %48, %49 : vector<128x1xf32>
      %51 = arith.mulf %45, %45 : vector<128x1xf32>
      %52 = arith.subf %50, %51 : vector<128x1xf32>
      %cst_26 = arith.constant 0.000000e+00 : f32
      %53 = vector.broadcast %cst_26 : f32 to vector<128x1xf32>
      %54 = arith.maximumf %52, %53 : vector<128x1xf32>
      %55 = vector.broadcast %45 : vector<128x1xf32> to vector<128x128xf32>
      %56 = arith.subf %41, %55 : vector<128x128xf32>
      %cst_27 = arith.constant 9.99999974E-6 : f32
      %57 = vector.broadcast %cst_27 : f32 to vector<128x1xf32>
      %58 = arith.addf %54, %57 : vector<128x1xf32>
      %59 = math.rsqrt %58 : vector<128x1xf32>
      %60 = vector.broadcast %59 : vector<128x1xf32> to vector<128x128xf32>
      %61 = arith.mulf %56, %60 : vector<128x128xf32>
      %62 = vector.broadcast %13 : vector<1x128xf32> to vector<128x128xf32>
      %63 = arith.mulf %61, %62 : vector<128x128xf32>
      %64 = arith.truncf %63 : vector<128x128xf32> to vector<128x128xbf16>
      %cst_28 = arith.constant dense<0.000000e+00> : vector<16x128xf32>
      %65 = tpu.matmul %39, %64, %cst_28 {dimension_numbers = #tpu.dot_dimension_numbers<[1], [0], [0], [1], [0, 0, 1, 1], [], []>} : vector<16x128xbf16>, vector<128x128xbf16>, vector<16x128xf32> -> vector<16x128xf32>
      %66 = arith.addf %24, %65 : vector<16x128xf32>
      %c0_29 = arith.constant 0 : index
      %c0_30 = arith.constant 0 : index
      %67 = vector.load %arg5[%c0_29, %c0_30] : memref<16x1xf32, #tpu.memory_space<vmem>>, vector<16x1xf32>
      %68 = vector.broadcast %67 : vector<16x1xf32> to vector<16x128xf32>
      %69 = arith.mulf %68, %66 : vector<16x128xf32>
      %70 = arith.truncf %69 : vector<16x128xf32> to vector<16x128xbf16>
      %cst_31 = arith.constant dense<0.000000e+00> : vector<16x128xf32>
      %71 = tpu.matmul %70, %5, %cst_31 {dimension_numbers = #tpu.dot_dimension_numbers<[1], [0], [0], [1], [0, 0, 1, 1], [], []>} : vector<16x128xbf16>, vector<128x128xbf16>, vector<16x128xf32> -> vector<16x128xf32>
      %72 = arith.addf %arg8, %71 : vector<16x128xf32>
      %cst_32 = arith.constant 5.000000e-01 : f32
      %73 = vector.broadcast %cst_32 : f32 to vector<16x128xf32>
      %74 = arith.mulf %73, %72 : vector<16x128xf32>
      %75 = arith.subf %arg8, %74 : vector<16x128xf32>
      %76 = arith.truncf %75 : vector<16x128xf32> to vector<16x128xbf16>
      %cst_33 = arith.constant dense<0.000000e+00> : vector<16x128xf32>
      %77 = tpu.matmul %76, %3, %cst_33 {dimension_numbers = #tpu.dot_dimension_numbers<[1], [0], [0], [1], [0, 0, 1, 1], [], []>} : vector<16x128xbf16>, vector<128x128xbf16>, vector<16x128xf32> -> vector<16x128xf32>
      %c1_34 = arith.constant 1 : index
      %c0_35 = arith.constant 0 : index
      %c0_36 = arith.constant 0 : index
      %78 = vector.load %arg2[%c1_34, %c0_35, %c0_36] : memref<2x16x128xf32, #tpu.memory_space<vmem>>, vector<1x16x128xf32>
      %79 = vector.shape_cast %78 : vector<1x16x128xf32> to vector<16x128xf32>
      %80 = arith.addf %77, %79 : vector<16x128xf32>
      %81 = arith.truncf %80 : vector<16x128xf32> to vector<16x128xbf16>
      %cst_37 = arith.constant 0.000000e+00 : f32
      %82 = vector.broadcast %cst_37 : f32 to vector<16x128xf32>
      %c0_38 = arith.constant 0 : index
      %c0_39 = arith.constant 0 : index
      %83 = vector.load %arg0[%c0_38, %c0_39] : memref<1x128xi32, #tpu.memory_space<vmem>>, vector<1x128xi32>
      %c0_40 = arith.constant 0 : index
      %c0_41 = arith.constant 0 : index
      %84 = vector.load %arg1[%c0_40, %c0_41] : memref<1x128xi32, #tpu.memory_space<vmem>>, vector<1x128xi32>
      %85 = vector.broadcast %8 : vector<16x1xi32> to vector<16x128xi32>
      %86 = vector.broadcast %83 : vector<1x128xi32> to vector<16x128xi32>
      %87 = arith.cmpi eq, %85, %86 : vector<16x128xi32>
      %88 = arith.extui %87 : vector<16x128xi1> to vector<16x128xi32>
      %89 = arith.sitofp %88 : vector<16x128xi32> to vector<16x128xf32>
      %90 = arith.truncf %89 : vector<16x128xf32> to vector<16x128xbf16>
      %91 = vector.broadcast %8 : vector<16x1xi32> to vector<16x128xi32>
      %92 = vector.broadcast %84 : vector<1x128xi32> to vector<16x128xi32>
      %93 = arith.cmpi eq, %91, %92 : vector<16x128xi32>
      %94 = arith.extui %93 : vector<16x128xi1> to vector<16x128xi32>
      %95 = arith.sitofp %94 : vector<16x128xi32> to vector<16x128xf32>
      %96 = arith.truncf %95 : vector<16x128xf32> to vector<16x128xbf16>
      %97 = arith.subf %90, %96 : vector<16x128xbf16>
      %cst_42 = arith.constant dense<0.000000e+00> : vector<128x128xf32>
      %98 = tpu.matmul %97, %81, %cst_42 {dimension_numbers = #tpu.dot_dimension_numbers<[0], [0], [1], [1], [0, 1, 1, 1], [], []>} : vector<16x128xbf16>, vector<16x128xbf16>, vector<128x128xf32> -> vector<128x128xf32>
      %99 = math.tanh %98 : vector<128x128xf32>
      %cst_43 = arith.constant dense<0.000000e+00> : vector<128xf32>
      %100 = vector.multi_reduction <add>, %99, %cst_43 [1] : vector<128x128xf32> to vector<128xf32>
      %101 = vector.shape_cast %100 : vector<128xf32> to vector<128x1xf32>
      %cst_44 = arith.constant 3.125000e-02 : f32
      %102 = vector.broadcast %cst_44 : f32 to vector<128x1xf32>
      %103 = arith.mulf %101, %102 : vector<128x1xf32>
      %104 = arith.mulf %99, %99 : vector<128x128xf32>
      %cst_45 = arith.constant dense<0.000000e+00> : vector<128xf32>
      %105 = vector.multi_reduction <add>, %104, %cst_45 [1] : vector<128x128xf32> to vector<128xf32>
      %106 = vector.shape_cast %105 : vector<128xf32> to vector<128x1xf32>
      %cst_46 = arith.constant 3.125000e-02 : f32
      %107 = vector.broadcast %cst_46 : f32 to vector<128x1xf32>
      %108 = arith.mulf %106, %107 : vector<128x1xf32>
      %109 = arith.mulf %103, %103 : vector<128x1xf32>
      %110 = arith.subf %108, %109 : vector<128x1xf32>
      %cst_47 = arith.constant 0.000000e+00 : f32
      %111 = vector.broadcast %cst_47 : f32 to vector<128x1xf32>
      %112 = arith.maximumf %110, %111 : vector<128x1xf32>
      %113 = vector.broadcast %103 : vector<128x1xf32> to vector<128x128xf32>
      %114 = arith.subf %99, %113 : vector<128x128xf32>
      %cst_48 = arith.constant 9.99999974E-6 : f32
      %115 = vector.broadcast %cst_48 : f32 to vector<128x1xf32>
      %116 = arith.addf %112, %115 : vector<128x1xf32>
      %117 = math.rsqrt %116 : vector<128x1xf32>
      %118 = vector.broadcast %117 : vector<128x1xf32> to vector<128x128xf32>
      %119 = arith.mulf %114, %118 : vector<128x128xf32>
      %120 = vector.broadcast %13 : vector<1x128xf32> to vector<128x128xf32>
      %121 = arith.mulf %119, %120 : vector<128x128xf32>
      %122 = arith.truncf %121 : vector<128x128xf32> to vector<128x128xbf16>
      %cst_49 = arith.constant dense<0.000000e+00> : vector<16x128xf32>
      %123 = tpu.matmul %97, %122, %cst_49 {dimension_numbers = #tpu.dot_dimension_numbers<[1], [0], [0], [1], [0, 0, 1, 1], [], []>} : vector<16x128xbf16>, vector<128x128xbf16>, vector<16x128xf32> -> vector<16x128xf32>
      %124 = arith.addf %82, %123 : vector<16x128xf32>
      %c0_50 = arith.constant 0 : index
      %c0_51 = arith.constant 0 : index
      %125 = vector.load %arg5[%c0_50, %c0_51] : memref<16x1xf32, #tpu.memory_space<vmem>>, vector<16x1xf32>
      %126 = vector.broadcast %125 : vector<16x1xf32> to vector<16x128xf32>
      %127 = arith.mulf %126, %124 : vector<16x128xf32>
      %128 = arith.truncf %127 : vector<16x128xf32> to vector<16x128xbf16>
      %cst_52 = arith.constant dense<0.000000e+00> : vector<16x128xf32>
      %129 = tpu.matmul %128, %7, %cst_52 {dimension_numbers = #tpu.dot_dimension_numbers<[1], [0], [0], [1], [0, 0, 1, 1], [], []>} : vector<16x128xbf16>, vector<128x128xbf16>, vector<16x128xf32> -> vector<16x128xf32>
      %130 = arith.addf %75, %129 : vector<16x128xf32>
      %cst_53 = arith.constant 5.000000e-01 : f32
      %131 = vector.broadcast %cst_53 : f32 to vector<16x128xf32>
      %132 = arith.mulf %131, %130 : vector<16x128xf32>
      %133 = arith.subf %75, %132 : vector<16x128xf32>
      scf.yield %133 : vector<16x128xf32>
    }
    %c0_10 = arith.constant 0 : index
    %c0_11 = arith.constant 0 : index
    %17 = vector.load %arg6[%c0_10, %c0_11] : memref<16x128xf32, #tpu.memory_space<vmem>>, vector<16x128xf32>
    tpu.vector_store %arg6[%c0_10, %c0_11], %16 {strides = array<i32>} : memref<16x128xf32, #tpu.memory_space<vmem>>, vector<16x128xf32>,
    return
  }
}

</mosaic_0001>

<llo_original>
// kernel: tpu_custom_call.1
$region0: #{tpu_custom_call.1}
  #allocation0 [shape = 'u32[]', space=smem, size = 0x4, offset = 0x4, fixed_abs, tag = 'smem constant byte address 0x4 - core index']
  #allocation1 [shape = 'u32[144,128]{1,0:T(1,128)}', space=vmem, size = 0x12000, scoped, tag = 'internal scratch']
  %s0 = inlined_call_operand.vmem [shape: s32[1,128], index: 0, kind: input, shape index: {}]
  %s1 = inlined_call_operand.vmem [shape: s32[1,128], index: 1, kind: input, shape index: {}]
  %s2 = inlined_call_operand.hbm [shape: f32[2,16,128], index: 2, kind: input, shape index: {}]
  %s3 = inlined_call_operand.hbm [shape: bf16[2,128,128], index: 3, kind: input, shape index: {}]
  %s4 = inlined_call_operand.hbm [shape: bf16[2,128,128], index: 4, kind: input, shape index: {}]
  %s5 = inlined_call_operand.vmem [shape: f32[16,1], index: 5, kind: input, shape index: {}]
  %s6 = inlined_call_operand.hbm [shape: f32[16,128], index: 6, kind: output, shape index: {}]
  %s7 = sld [smem:[#allocation0]]
  $region53: #{tpu_custom_call.1} parent=0
    _
  %s9 = ssub.s32 1, %s7
  %s10 = scalar_select 0, %s9, %s7
  $region1: #{tpu_custom_call.1} parent=0
    #allocation2 [shape = 'u8[16384]{0}', space=vmem, size = 0x4000, scoped, tag = 'input window, operand 2, single buffered']
    #allocation3 [shape = 's32[1]{0}', space=sflag, size = 0x4, scoped, tag = 'scoped memory for tpu_custom_call.1']
    #allocation4 [shape = 's32[1]{0}', space=sflag, size = 0x4, scoped, tag = 'scoped memory for tpu_custom_call.1']
    #allocation5 [shape = 'u8[65536]{0}', space=vmem, size = 0x10000, scoped, tag = 'input window, operand 3, single buffered']
    #allocation6 [shape = 's32[1]{0}', space=sflag, size = 0x4, scoped, tag = 'scoped memory for tpu_custom_call.1']
    #allocation7 [shape = 'u8[65536]{0}', space=vmem, size = 0x10000, scoped, tag = 'input window, operand 4, single buffered']
    #allocation8 [shape = 'u8[8192]{0}', space=vmem, size = 0x2000, scoped, tag = 'output window, operand 0, single buffered']
    %11 = vsyncpa [#allocation3], 0
    %12 = vsyncpa [#allocation6], 0
    %13 = vsyncpa [#allocation4], 0
    // Predicated region
    $region2: #{tpu_custom_call.1} parent=1 // pred_check
      _
    $region3: #{tpu_custom_call.1} parent=1 // pred_check_branch
      %15 = sbr.rel (0) target = $region5
    $region4: #{tpu_custom_call.1} parent=1 // pred_region
      _
    $region5: #{tpu_custom_call.1} parent=1 // pred_fallthru
      _
    // Predicated region
    $region6: #{tpu_custom_call.1} parent=1 // pred_check
      _
    $region7: #{tpu_custom_call.1} parent=1 // pred_check_branch
      %17 = sbr.rel (0) target = $region9
    $region8: #{tpu_custom_call.1} parent=1 // pred_region
      _
    $region9: #{tpu_custom_call.1} parent=1 // pred_fallthru
      _
    // Predicated region
    $region10: #{tpu_custom_call.1} parent=1 // pred_check
      _
    $region11: #{tpu_custom_call.1} parent=1 // pred_check_branch
      %19 = sbr.rel (0) target = $region13
    $region12: #{tpu_custom_call.1} parent=1 // pred_region
      %s21 = ssub.s32 512, 512
      %22 = vsyncadd [#allocation3], %s21
      %s23 = sshll.u32 [#allocation2], 4
      %s24 = int_to_ptr.vmem [resolvable:$true] %s23
      %29 = dma.hbm_to_vmem [thread:$0]  %s2, 512, %s24, [#allocation3], 128, 128, 8
    $region13: #{tpu_custom_call.1} parent=1 // pred_fallthru
      _
    // Predicated region
    $region14: #{tpu_custom_call.1} parent=1 // pred_check
      _
    $region15: #{tpu_custom_call.1} parent=1 // pred_check_branch
      %31 = sbr.rel (0) target = $region17
    $region16: #{tpu_custom_call.1} parent=1 // pred_region
      %s33 = ssub.s32 2048, 2048
      %34 = vsyncadd [#allocation6], %s33
      %s35 = sshll.u32 [#allocation5], 4
      %s36 = int_to_ptr.vmem [resolvable:$true] %s35
      %41 = dma.hbm_to_vmem [thread:$0]  %s3, 2048, %s36, [#allocation6], 64, 64, 4
    $region17: #{tpu_custom_call.1} parent=1 // pred_fallthru
      _
    // Predicated region
    $region18: #{tpu_custom_call.1} parent=1 // pred_check
      _
    $region19: #{tpu_custom_call.1} parent=1 // pred_check_branch
      %43 = sbr.rel (0) target = $region21
    $region20: #{tpu_custom_call.1} parent=1 // pred_region
      %s45 = ssub.s32 2048, 2048
      %46 = vsyncadd [#allocation6], %s45
      %s47 = sshll.u32 [#allocation7], 4
      %s48 = int_to_ptr.vmem [resolvable:$true] %s47
      %53 = dma.hbm_to_vmem [thread:$0]  %s4, 2048, %s48, [#allocation6], 64, 64, 4
    $region21: #{tpu_custom_call.1} parent=1 // pred_fallthru
      _
    // Predicated region
    $region22: #{tpu_custom_call.1} parent=1 // pred_check
      _
    $region23: #{tpu_custom_call.1} parent=1 // pred_check_branch
      %55 = sbr.rel (0) target = $region25
    $region24: #{tpu_custom_call.1} parent=1 // pred_region
      _
    $region25: #{tpu_custom_call.1} parent=1 // pred_fallthru
      _
    // Predicated region
    $region26: #{tpu_custom_call.1} parent=1 // pred_check
      _
    $region27: #{tpu_custom_call.1} parent=1 // pred_check_branch
      %57 = sbr.rel (0) target = $region29
    $region28: #{tpu_custom_call.1} parent=1 // pred_region
      %58 = dma.done [#allocation3], 512
    $region29: #{tpu_custom_call.1} parent=1 // pred_fallthru
      _
    // Predicated region
    $region30: #{tpu_custom_call.1} parent=1 // pred_check
      _
    $region31: #{tpu_custom_call.1} parent=1 // pred_check_branch
      %60 = sbr.rel (0) target = $region33
    $region32: #{tpu_custom_call.1} parent=1 // pred_region
      %61 = dma.done [#allocation6], 2048
    $region33: #{tpu_custom_call.1} parent=1 // pred_fallthru
      _
    // Predicated region
    $region34: #{tpu_custom_call.1} parent=1 // pred_check
      _
    $region35: #{tpu_custom_call.1} parent=1 // pred_check_branch
      %63 = sbr.rel (0) target = $region37
    $region36: #{tpu_custom_call.1} parent=1 // pred_region
      %64 = dma.done [#allocation6], 2048
    $region37: #{tpu_custom_call.1} parent=1 // pred_fallthru
      _
    %v66 = vld [vmem:[#allocation5] sm:$0xf]
    %v67 = vld [vmem:[#allocation5 + $0x4] sm:$0xf]
    %v68 = vld [vmem:[#allocation5 + $0x8] sm:$0xf]
    %v69 = vld [vmem:[#allocation5 + $0xc] sm:$0xf]
    %v70 = vld [vmem:[#allocation5 + $0x10] sm:$0xf]
    %v71 = vld [vmem:[#allocation5 + $0x14] sm:$0xf]
    %v72 = vld [vmem:[#allocation5 + $0x18] sm:$0xf]
    %v73 = vld [vmem:[#allocation5 + $0x1c] sm:$0xf]
    %v74 = vld [vmem:[#allocation5 + $0x20] sm:$0xf]
    %v75 = vld [vmem:[#allocation5 + $0x24] sm:$0xf]
    %v76 = vld [vmem:[#allocation5 + $0x28] sm:$0xf]
    %v77 = vld [vmem:[#allocation5 + $0x2c] sm:$0xf]
    %v78 = vld [vmem:[#allocation5 + $0x30] sm:$0xf]
    %v79 = vld [vmem:[#allocation5 + $0x34] sm:$0xf]
    %v80 = vld [vmem:[#allocation5 + $0x38] sm:$0xf]
    %v81 = vld [vmem:[#allocation5 + $0x3c] sm:$0xf]
    %s82 = scalar_lea.vmem [#allocation5], 64
    %v83 = vld [vmem:[%s82] sm:$0xf]
    %v84 = vld [vmem:[%s82 + $0x4] sm:$0xf]
    %v85 = vld [vmem:[%s82 + $0x8] sm:$0xf]
    %v86 = vld [vmem:[%s82 + $0xc] sm:$0xf]
    %v87 = vld [vmem:[%s82 + $0x10] sm:$0xf]
    %v88 = vld [vmem:[%s82 + $0x14] sm:$0xf]
    %v89 = vld [vmem:[%s82 + $0x18] sm:$0xf]
    %v90 = vld [vmem:[%s82 + $0x1c] sm:$0xf]
    %v91 = vld [vmem:[%s82 + $0x20] sm:$0xf]
    %v92 = vld [vmem:[%s82 + $0x24] sm:$0xf]
    %v93 = vld [vmem:[%s82 + $0x28] sm:$0xf]
    %v94 = vld [vmem:[%s82 + $0x2c] sm:$0xf]
    %v95 = vld [vmem:[%s82 + $0x30] sm:$0xf]
    %v96 = vld [vmem:[%s82 + $0x34] sm:$0xf]
    %v97 = vld [vmem:[%s82 + $0x38] sm:$0xf]
    %v98 = vld [vmem:[%s82 + $0x3c] sm:$0xf]
    %v99 = vld [vmem:[#allocation7] sm:$0xf]
    %v100 = vld [vmem:[#allocation7 + $0x4] sm:$0xf]
    %v101 = vld [vmem:[#allocation7 + $0x8] sm:$0xf]
    %v102 = vld [vmem:[#allocation7 + $0xc] sm:$0xf]
    %v103 = vld [vmem:[#allocation7 + $0x10] sm:$0xf]
    %v104 = vld [vmem:[#allocation7 + $0x14] sm:$0xf]
    %v105 = vld [vmem:[#allocation7 + $0x18] sm:$0xf]
    %v106 = vld [vmem:[#allocation7 + $0x1c] sm:$0xf]
    %v107 = vld [vmem:[#allocation7 + $0x20] sm:$0xf]
    %v108 = vld [vmem:[#allocation7 + $0x24] sm:$0xf]
    %v109 = vld [vmem:[#allocation7 + $0x28] sm:$0xf]
    %v110 = vld [vmem:[#allocation7 + $0x2c] sm:$0xf]
    %v111 = vld [vmem:[#allocation7 + $0x30] sm:$0xf]
    %v112 = vld [vmem:[#allocation7 + $0x34] sm:$0xf]
    %v113 = vld [vmem:[#allocation7 + $0x38] sm:$0xf]
    %v114 = vld [vmem:[#allocation7 + $0x3c] sm:$0xf]
    %s115 = scalar_lea.vmem [#allocation7], 64
    %v116 = vld [vmem:[%s115] sm:$0xf]
    %v117 = vld [vmem:[%s115 + $0x4] sm:$0xf]
    %v118 = vld [vmem:[%s115 + $0x8] sm:$0xf]
    %v119 = vld [vmem:[%s115 + $0xc] sm:$0xf]
    %v120 = vld [vmem:[%s115 + $0x10] sm:$0xf]
    %v121 = vld [vmem:[%s115 + $0x14] sm:$0xf]
    %v122 = vld [vmem:[%s115 + $0x18] sm:$0xf]
    %v123 = vld [vmem:[%s115 + $0x1c] sm:$0xf]
    %v124 = vld [vmem:[%s115 + $0x20] sm:$0xf]
    %v125 = vld [vmem:[%s115 + $0x24] sm:$0xf]
    %v126 = vld [vmem:[%s115 + $0x28] sm:$0xf]
    %v127 = vld [vmem:[%s115 + $0x2c] sm:$0xf]
    %v128 = vld [vmem:[%s115 + $0x30] sm:$0xf]
    %v129 = vld [vmem:[%s115 + $0x34] sm:$0xf]
    %v130 = vld [vmem:[%s115 + $0x38] sm:$0xf]
    %v131 = vld [vmem:[%s115 + $0x3c] sm:$0xf]
    %v132 = vlaneseq
    %v133 = vshrl.u32 %v132, 7
    %v134 = vadd.s32 %v133, 8
    %v135 = vlaneseq
    %v136 = vand.u32 %v135, 127
    %vm137 = vcmp.lt.s32.totalorder %v136, 32
    %v138 = vsel %vm137, 1, 0
    %v139 = vcvt.s32.f32 %v138
    loop: start=0, step=1, limit=4
    $region38: #{tpu_custom_call.1} parent=1 // loop_pre_header
      _
    $region39: #{tpu_custom_call.1} parent=1 // loop_header
      %s141 = sphi 0, %s145
      %p142 = scmp.ge.s32.totalorder %s141, 4
      %v146 = vphi 0.0, %v1411
      %v147 = vphi 0.0, %v1412
    $region40: #{tpu_custom_call.1} parent=1 // loop_header_branch
      %144 = sbr.rel (%p142) target = $region44
    $region41: #{tpu_custom_call.1} parent=1 // loop_body
      %v148 = vpack.c.bf16 %v147, %v146
      %v149 = vld [vmem:[#allocation2] sm:$0xff]
      %v150 = vld [vmem:[#allocation2 + $0x8] sm:$0xff]
      %v167 = vunpack.c.l.b16 %v66
      %v168 = vunpack.c.l.b16 %v67
      %v169 = vunpack.c.l.b16 %v68
      %v170 = vunpack.c.l.b16 %v69
      %v171 = vunpack.c.l.b16 %v70
      %v172 = vunpack.c.l.b16 %v71
      %v173 = vunpack.c.l.b16 %v72
      %v174 = vunpack.c.l.b16 %v73
      %v175 = vunpack.c.l.b16 %v74
      %v176 = vunpack.c.l.b16 %v75
      %v177 = vunpack.c.l.b16 %v76
      %v178 = vunpack.c.l.b16 %v77
      %v179 = vunpack.c.l.b16 %v78
      %v180 = vunpack.c.l.b16 %v79
      %v181 = vunpack.c.l.b16 %v80
      %v182 = vunpack.c.l.b16 %v81
      %v183 = vpack.c.b16 %v168, %v167
      %v184 = vpack.c.b16 %v170, %v169
      %v185 = vpack.c.b16 %v172, %v171
      %v186 = vpack.c.b16 %v174, %v173
      %v187 = vpack.c.b16 %v176, %v175
      %v188 = vpack.c.b16 %v178, %v177
      %v189 = vpack.c.b16 %v180, %v179
      %v190 = vpack.c.b16 %v182, %v181
      %199 = vmatprep.subr.bf16.mxu0 0
      %200 = vmatpush1.bf16.msra.mxu0 %v183
      %201 = vmatprep.subr.bf16.mxu0 0
      %202 = vmatpush1.bf16.msra.mxu0 %v184
      %203 = vmatprep.subr.bf16.mxu0 0
      %204 = vmatpush1.bf16.msra.mxu0 %v185
      %205 = vmatprep.subr.bf16.mxu0 0
      %206 = vmatpush1.bf16.msra.mxu0 %v186
      %207 = vmatprep.subr.bf16.mxu0 0
      %208 = vmatpush1.bf16.msra.mxu0 %v187
      %209 = vmatprep.subr.bf16.mxu0 0
      %210 = vmatpush1.bf16.msra.mxu0 %v188
      %211 = vmatprep.subr.bf16.mxu0 0
      %212 = vmatpush1.bf16.msra.mxu0 %v189
      %213 = vmatprep.subr.bf16.mxu0 0
      %214 = vmatpush1.bf16.msra.mxu0 %v190
      %215 = vmatprep.subr.bf16.mxu0 0
      %216 = vmatpush1.bf16.msra.mxu0 0
      %217 = vmatprep.subr.bf16.mxu0 0
      %218 = vmatpush1.bf16.msra.mxu0 0
      %219 = vmatprep.subr.bf16.mxu0 0
      %220 = vmatpush1.bf16.msra.mxu0 0
      %221 = vmatprep.subr.bf16.mxu0 0
      %222 = vmatpush1.bf16.msra.mxu0 0
      %223 = vmatprep.subr.bf16.mxu0 0
      %224 = vmatpush1.bf16.msra.mxu0 0
      %225 = vmatprep.subr.bf16.mxu0 0
      %226 = vmatpush1.bf16.msra.mxu0 0
      %227 = vmatprep.subr.bf16.mxu0 0
      %228 = vmatpush1.bf16.msra.mxu0 0
      %229 = vmatprep.subr.bf16.mxu0 0
      %230 = vmatpush1.bf16.msra.mxu0 0
      %231 = vmatprep.mubr.bf16.mxu0 0
      %232 = vmatmul.mubr.bf16.gmra.mrb[0].mxu0 %v148
      %v233 = vpop.f32.mrb[0].mxu0
      %v234 = vadd.f32 %v149, %v233
      %v235 = vpop.f32.mrb[0].mxu0
      %v236 = vpop.f32.mrb[0].mxu0
      %v237 = vadd.f32 %v150, %v236
      %v238 = vpop.f32.mrb[0].mxu0
      %239 = vdwg.mxu0
      %v240 = vpack.c.bf16 %v237, %v234
      %v241 = vld [vmem:[%s0] sm:$0x1]
      %v242 = vld [vmem:[%s1] sm:$0x1]
      %v243 = vlaneseq
      %v244 = vshrl.u32 %v243, 7
      %v245 = vsub.s32 0, %v244
      %v246 = vrot.slane %v241, %v245
      %vm247 = vcmp.eq.s32.totalorder %v133, %v246
      %vm248 = vcmp.eq.s32.totalorder %v134, %v246
      %v249 = vsel %vm247, 1, 0
      %v250 = vsel %vm248, 1, 0
      %v251 = vcvt.s32.f32 %v249
      %v252 = vcvt.s32.f32 %v250
      %v253 = vpack.c.bf16 %v252, %v251
      %v254 = vlaneseq
      %v255 = vshrl.u32 %v254, 7
      %v256 = vsub.s32 0, %v255
      %v257 = vrot.slane %v242, %v256
      %vm258 = vcmp.eq.s32.totalorder %v133, %v257
      %vm259 = vcmp.eq.s32.totalorder %v134, %v257
      %v260 = vsel %vm258, 1, 0
      %v261 = vsel %vm259, 1, 0
      %v262 = vcvt.s32.f32 %v260
      %v263 = vcvt.s32.f32 %v261
      %v264 = vpack.c.bf16 %v263, %v262
      %v265 = vsub.bf16 %v253, %v264
      %266 = vxpose.xlu0.c.b16.start [1/8] %v265, 128
      %267 = vxpose.xlu0.c.b16.cont [2/8] 0, 128
      %268 = vxpose.xlu0.c.b16.cont [3/8] 0, 128
      %269 = vxpose.xlu0.c.b16.cont [4/8] 0, 128
      %270 = vxpose.xlu0.c.b16.cont [5/8] 0, 128
      %271 = vxpose.xlu0.c.b16.cont [6/8] 0, 128
      %272 = vxpose.xlu0.c.b16.cont [7/8] 0, 128
      %273 = vxpose.xlu0.c.b16.end [8/8] 0, 128
      %v274 = vpop.trf.xlu0
      %v275 = vpop.trf.xlu0
      %v276 = vpop.trf.xlu0
      %v277 = vpop.trf.xlu0
      %v278 = vpop.trf.xlu0
      %v279 = vpop.trf.xlu0
      %v280 = vpop.trf.xlu0
      %v281 = vpop.trf.xlu0
      %vm282 = vcmask 130048
      %v284 = vsel %vm282, %v274, 0
      %v287 = vsel %vm282, %v275, 0
      %v290 = vsel %vm282, %v276, 0
      %v293 = vsel %vm282, %v277, 0
      %v296 = vsel %vm282, %v278, 0
      %v299 = vsel %vm282, %v279, 0
      %v302 = vsel %vm282, %v280, 0
      %v305 = vsel %vm282, %v281, 0
      %307 = vmatprep.subr.bf16.mxu0 0
      %308 = vmatpush1.bf16.msra.mxu0 %v240
      %309 = vmatprep.subr.bf16.mxu0 0
      %310 = vmatpush1.bf16.msra.mxu0 0
      %311 = vmatprep.subr.bf16.mxu0 0
      %312 = vmatpush1.bf16.msra.mxu0 0
      %313 = vmatprep.subr.bf16.mxu0 0
      %314 = vmatpush1.bf16.msra.mxu0 0
      %315 = vmatprep.subr.bf16.mxu0 0
      %316 = vmatpush1.bf16.msra.mxu0 0
      %317 = vmatprep.subr.bf16.mxu0 0
      %318 = vmatpush1.bf16.msra.mxu0 0
      %319 = vmatprep.subr.bf16.mxu0 0
      %320 = vmatpush1.bf16.msra.mxu0 0
      %321 = vmatprep.subr.bf16.mxu0 0
      %322 = vmatpush1.bf16.msra.mxu0 0
      %323 = vmatprep.subr.bf16.mxu0 0
      %324 = vmatpush1.bf16.msra.mxu0 0
      %325 = vmatprep.subr.bf16.mxu0 0
      %326 = vmatpush1.bf16.msra.mxu0 0
      %327 = vmatprep.subr.bf16.mxu0 0
      %328 = vmatpush1.bf16.msra.mxu0 0
      %329 = vmatprep.subr.bf16.mxu0 0
      %330 = vmatpush1.bf16.msra.mxu0 0
      %331 = vmatprep.subr.bf16.mxu0 0
      %332 = vmatpush1.bf16.msra.mxu0 0
      %333 = vmatprep.subr.bf16.mxu0 0
      %334 = vmatpush1.bf16.msra.mxu0 0
      %335 = vmatprep.subr.bf16.mxu0 0
      %336 = vmatpush1.bf16.msra.mxu0 0
      %337 = vmatprep.subr.bf16.mxu0 0
      %338 = vmatpush1.bf16.msra.mxu0 0
      %339 = vmatprep.mubr.bf16.mxu0 0
      %340 = vmatmul.mubr.bf16.gmra.mrb[0].mxu0 %v284
      %v341 = vpop.f32.mrb[0].mxu0
      %v342 = vadd.f32 0.0, %v341
      %v343 = vpop.f32.mrb[0].mxu0
      %v344 = vpop.f32.mrb[0].mxu0
      %v345 = vadd.f32 0.0, %v344
      %v346 = vpop.f32.mrb[0].mxu0
      %347 = vmatprep.mubr.bf16.mxu0 0
      %348 = vmatmul.mubr.bf16.gmra.mrb[0].mxu0 %v287
      %v349 = vpop.f32.mrb[0].mxu0
      %v350 = vadd.f32 0.0, %v349
      %v351 = vpop.f32.mrb[0].mxu0
      %v352 = vpop.f32.mrb[0].mxu0
      %v353 = vadd.f32 0.0, %v352
      %v354 = vpop.f32.mrb[0].mxu0
      %355 = vmatprep.mubr.bf16.mxu0 0
      %356 = vmatmul.mubr.bf16.gmra.mrb[0].mxu0 %v290
      %v357 = vpop.f32.mrb[0].mxu0
      %v358 = vadd.f32 0.0, %v357
      %v359 = vpop.f32.mrb[0].mxu0
      %v360 = vpop.f32.mrb[0].mxu0
      %v361 = vadd.f32 0.0, %v360
      %v362 = vpop.f32.mrb[0].mxu0
      %363 = vmatprep.mubr.bf16.mxu0 0
      %364 = vmatmul.mubr.bf16.gmra.mrb[0].mxu0 %v293
      %v365 = vpop.f32.mrb[0].mxu0
      %v366 = vadd.f32 0.0, %v365
      %v367 = vpop.f32.mrb[0].mxu0
      %v368 = vpop.f32.mrb[0].mxu0
      %v369 = vadd.f32 0.0, %v368
      %v370 = vpop.f32.mrb[0].mxu0
      %371 = vmatprep.mubr.bf16.mxu0 0
      %372 = vmatmul.mubr.bf16.gmra.mrb[0].mxu0 %v296
      %v373 = vpop.f32.mrb[0].mxu0
      %v374 = vadd.f32 0.0, %v373
      %v375 = vpop.f32.mrb[0].mxu0
      %v376 = vpop.f32.mrb[0].mxu0
      %v377 = vadd.f32 0.0, %v376
      %v378 = vpop.f32.mrb[0].mxu0
      %379 = vmatprep.mubr.bf16.mxu0 0
      %380 = vmatmul.mubr.bf16.gmra.mrb[0].mxu0 %v299
      %v381 = vpop.f32.mrb[0].mxu0
      %v382 = vadd.f32 0.0, %v381
      %v383 = vpop.f32.mrb[0].mxu0
      %v384 = vpop.f32.mrb[0].mxu0
      %v385 = vadd.f32 0.0, %v384
      %v386 = vpop.f32.mrb[0].mxu0
      %387 = vmatprep.mubr.bf16.mxu0 0
      %388 = vmatmul.mubr.bf16.gmra.mrb[0].mxu0 %v302
      %v389 = vpop.f32.mrb[0].mxu0
      %v390 = vadd.f32 0.0, %v389
      %v391 = vpop.f32.mrb[0].mxu0
      %v392 = vpop.f32.mrb[0].mxu0
      %v393 = vadd.f32 0.0, %v392
      %v394 = vpop.f32.mrb[0].mxu0
      %395 = vmatprep.mubr.bf16.mxu0 0
      %396 = vmatmul.mubr.bf16.gmra.mrb[0].mxu0 %v305
      %v397 = vpop.f32.mrb[0].mxu0
      %v398 = vadd.f32 0.0, %v397
      %v399 = vpop.f32.mrb[0].mxu0
      %v400 = vpop.f32.mrb[0].mxu0
      %v401 = vadd.f32 0.0, %v400
      %v402 = vpop.f32.mrb[0].mxu0
      %403 = vdwg.mxu0
      %v404 = vtanh.pop %v342
      %v405 = vtanh.pop %v345
      %v406 = vtanh.pop %v350
      %v407 = vtanh.pop %v353
      %v408 = vtanh.pop %v358
      %v409 = vtanh.pop %v361
      %v410 = vtanh.pop %v366
      %v411 = vtanh.pop %v369
      %v412 = vtanh.pop %v374
      %v413 = vtanh.pop %v377
      %v414 = vtanh.pop %v382
      %v415 = vtanh.pop %v385
      %v416 = vtanh.pop %v390
      %v417 = vtanh.pop %v393
      %v418 = vtanh.pop %v398
      %v419 = vtanh.pop %v401
      %420 = vadd.xlane.f32.xlu0 %v404
      %v421 = vpop.xlane.xlu0 %420
      %422 = vadd.xlane.f32.xlu0 %v405
      %v423 = vpop.xlane.xlu0 %422
      %424 = vadd.xlane.f32.xlu0 %v406
      %v425 = vpop.xlane.xlu0 %424
      %426 = vadd.xlane.f32.xlu0 %v407
      %v427 = vpop.xlane.xlu0 %426
      %428 = vadd.xlane.f32.xlu0 %v408
      %v429 = vpop.xlane.xlu0 %428
      %430 = vadd.xlane.f32.xlu0 %v409
      %v431 = vpop.xlane.xlu0 %430
      %432 = vadd.xlane.f32.xlu0 %v410
      %v433 = vpop.xlane.xlu0 %432
      %434 = vadd.xlane.f32.xlu0 %v411
      %v435 = vpop.xlane.xlu0 %434
      %436 = vadd.xlane.f32.xlu0 %v412
      %v437 = vpop.xlane.xlu0 %436
      %438 = vadd.xlane.f32.xlu0 %v413
      %v439 = vpop.xlane.xlu0 %438
      %440 = vadd.xlane.f32.xlu0 %v414
      %v441 = vpop.xlane.xlu0 %440
      %442 = vadd.xlane.f32.xlu0 %v415
      %v443 = vpop.xlane.xlu0 %442
      %444 = vadd.xlane.f32.xlu0 %v416
      %v445 = vpop.xlane.xlu0 %444
      %446 = vadd.xlane.f32.xlu0 %v417
      %v447 = vpop.xlane.xlu0 %446
      %448 = vadd.xlane.f32.xlu0 %v418
      %v449 = vpop.xlane.xlu0 %448
      %450 = vadd.xlane.f32.xlu0 %v419
      %v451 = vpop.xlane.xlu0 %450
      %v452 = vmul.f32 %v421, 0.03125
      %v453 = vmul.f32 %v423, 0.03125
      %v454 = vmul.f32 %v425, 0.03125
      %v455 = vmul.f32 %v427, 0.03125
      %v456 = vmul.f32 %v429, 0.03125
      %v457 = vmul.f32 %v431, 0.03125
      %v458 = vmul.f32 %v433, 0.03125
      %v459 = vmul.f32 %v435, 0.03125
      %v460 = vmul.f32 %v437, 0.03125
      %v461 = vmul.f32 %v439, 0.03125
      %v462 = vmul.f32 %v441, 0.03125
      %v463 = vmul.f32 %v443, 0.03125
      %v464 = vmul.f32 %v445, 0.03125
      %v465 = vmul.f32 %v447, 0.03125
      %v466 = vmul.f32 %v449, 0.03125
      %v467 = vmul.f32 %v451, 0.03125
      %v468 = vmul.f32 %v404, %v404
      %v469 = vmul.f32 %v405, %v405
      %v470 = vmul.f32 %v406, %v406
      %v471 = vmul.f32 %v407, %v407
      %v472 = vmul.f32 %v408, %v408
      %v473 = vmul.f32 %v409, %v409
      %v474 = vmul.f32 %v410, %v410
      %v475 = vmul.f32 %v411, %v411
      %v476 = vmul.f32 %v412, %v412
      %v477 = vmul.f32 %v413, %v413
      %v478 = vmul.f32 %v414, %v414
      %v479 = vmul.f32 %v415, %v415
      %v480 = vmul.f32 %v416, %v416
      %v481 = vmul.f32 %v417, %v417
      %v482 = vmul.f32 %v418, %v418
      %v483 = vmul.f32 %v419, %v419
      %484 = vadd.xlane.f32.xlu0 %v468
      %v485 = vpop.xlane.xlu0 %484
      %486 = vadd.xlane.f32.xlu0 %v469
      %v487 = vpop.xlane.xlu0 %486
      %488 = vadd.xlane.f32.xlu0 %v470
      %v489 = vpop.xlane.xlu0 %488
      %490 = vadd.xlane.f32.xlu0 %v471
      %v491 = vpop.xlane.xlu0 %490
      %492 = vadd.xlane.f32.xlu0 %v472
      %v493 = vpop.xlane.xlu0 %492
      %494 = vadd.xlane.f32.xlu0 %v473
      %v495 = vpop.xlane.xlu0 %494
      %496 = vadd.xlane.f32.xlu0 %v474
      %v497 = vpop.xlane.xlu0 %496
      %498 = vadd.xlane.f32.xlu0 %v475
      %v499 = vpop.xlane.xlu0 %498
      %500 = vadd.xlane.f32.xlu0 %v476
      %v501 = vpop.xlane.xlu0 %500
      %502 = vadd.xlane.f32.xlu0 %v477
      %v503 = vpop.xlane.xlu0 %502
      %504 = vadd.xlane.f32.xlu0 %v478
      %v505 = vpop.xlane.xlu0 %504
      %506 = vadd.xlane.f32.xlu0 %v479
      %v507 = vpop.xlane.xlu0 %506
      %508 = vadd.xlane.f32.xlu0 %v480
      %v509 = vpop.xlane.xlu0 %508
      %510 = vadd.xlane.f32.xlu0 %v481
      %v511 = vpop.xlane.xlu0 %510
      %512 = vadd.xlane.f32.xlu0 %v482
      %v513 = vpop.xlane.xlu0 %512
      %514 = vadd.xlane.f32.xlu0 %v483
      %v515 = vpop.xlane.xlu0 %514
      %v516 = vmul.f32 %v485, 0.03125
      %v517 = vmul.f32 %v487, 0.03125
      %v518 = vmul.f32 %v489, 0.03125
      %v519 = vmul.f32 %v491, 0.03125
      %v520 = vmul.f32 %v493, 0.03125
      %v521 = vmul.f32 %v495, 0.03125
      %v522 = vmul.f32 %v497, 0.03125
      %v523 = vmul.f32 %v499, 0.03125
      %v524 = vmul.f32 %v501, 0.03125
      %v525 = vmul.f32 %v503, 0.03125
      %v526 = vmul.f32 %v505, 0.03125
      %v527 = vmul.f32 %v507, 0.03125
      %v528 = vmul.f32 %v509, 0.03125
      %v529 = vmul.f32 %v511, 0.03125
      %v530 = vmul.f32 %v513, 0.03125
      %v531 = vmul.f32 %v515, 0.03125
      %v532 = vmul.f32 %v452, %v452
      %v533 = vmul.f32 %v453, %v453
      %v534 = vmul.f32 %v454, %v454
      %v535 = vmul.f32 %v455, %v455
      %v536 = vmul.f32 %v456, %v456
      %v537 = vmul.f32 %v457, %v457
      %v538 = vmul.f32 %v458, %v458
      %v539 = vmul.f32 %v459, %v459
      %v540 = vmul.f32 %v460, %v460
      %v541 = vmul.f32 %v461, %v461
      %v542 = vmul.f32 %v462, %v462
      %v543 = vmul.f32 %v463, %v463
      %v544 = vmul.f32 %v464, %v464
      %v545 = vmul.f32 %v465, %v465
      %v546 = vmul.f32 %v466, %v466
      %v547 = vmul.f32 %v467, %v467
      %v548 = vsub.f32 %v516, %v532
      %v549 = vsub.f32 %v517, %v533
      %v550 = vsub.f32 %v518, %v534
      %v551 = vsub.f32 %v519, %v535
      %v552 = vsub.f32 %v520, %v536
      %v553 = vsub.f32 %v521, %v537
      %v554 = vsub.f32 %v522, %v538
      %v555 = vsub.f32 %v523, %v539
      %v556 = vsub.f32 %v524, %v540
      %v557 = vsub.f32 %v525, %v541
      %v558 = vsub.f32 %v526, %v542
      %v559 = vsub.f32 %v527, %v543
      %v560 = vsub.f32 %v528, %v544
      %v561 = vsub.f32 %v529, %v545
      %v562 = vsub.f32 %v530, %v546
      %v563 = vsub.f32 %v531, %v547
      %v564 = vmax.f32 %v548, 0.0
      %v565 = vmax.f32 %v549, 0.0
      %v566 = vmax.f32 %v550, 0.0
      %v567 = vmax.f32 %v551, 0.0
      %v568 = vmax.f32 %v552, 0.0
      %v569 = vmax.f32 %v553, 0.0
      %v570 = vmax.f32 %v554, 0.0
      %v571 = vmax.f32 %v555, 0.0
      %v572 = vmax.f32 %v556, 0.0
      %v573 = vmax.f32 %v557, 0.0
      %v574 = vmax.f32 %v558, 0.0
      %v575 = vmax.f32 %v559, 0.0
      %v576 = vmax.f32 %v560, 0.0
      %v577 = vmax.f32 %v561, 0.0
      %v578 = vmax.f32 %v562, 0.0
      %v579 = vmax.f32 %v563, 0.0
      %v580 = vsub.f32 %v404, %v452
      %v581 = vsub.f32 %v405, %v453
      %v582 = vsub.f32 %v406, %v454
      %v583 = vsub.f32 %v407, %v455
      %v584 = vsub.f32 %v408, %v456
      %v585 = vsub.f32 %v409, %v457
      %v586 = vsub.f32 %v410, %v458
      %v587 = vsub.f32 %v411, %v459
      %v588 = vsub.f32 %v412, %v460
      %v589 = vsub.f32 %v413, %v461
      %v590 = vsub.f32 %v414, %v462
      %v591 = vsub.f32 %v415, %v463
      %v592 = vsub.f32 %v416, %v464
      %v593 = vsub.f32 %v417, %v465
      %v594 = vsub.f32 %v418, %v466
      %v595 = vsub.f32 %v419, %v467
      %v596 = vadd.f32 %v564, 1e-05
      %v597 = vadd.f32 %v565, 1e-05
      %v598 = vadd.f32 %v566, 1e-05
      %v599 = vadd.f32 %v567, 1e-05
      %v600 = vadd.f32 %v568, 1e-05
      %v601 = vadd.f32 %v569, 1e-05
      %v602 = vadd.f32 %v570, 1e-05
      %v603 = vadd.f32 %v571, 1e-05
      %v604 = vadd.f32 %v572, 1e-05
      %v605 = vadd.f32 %v573, 1e-05
      %v606 = vadd.f32 %v574, 1e-05
      %v607 = vadd.f32 %v575, 1e-05
      %v608 = vadd.f32 %v576, 1e-05
      %v609 = vadd.f32 %v577, 1e-05
      %v610 = vadd.f32 %v578, 1e-05
      %v611 = vadd.f32 %v579, 1e-05
      %v612 = vrsqrt.pop %v596
      %v613 = vrsqrt.pop %v597
      %v614 = vrsqrt.pop %v598
      %v615 = vrsqrt.pop %v599
      %v616 = vrsqrt.pop %v600
      %v617 = vrsqrt.pop %v601
      %v618 = vrsqrt.pop %v602
      %v619 = vrsqrt.pop %v603
      %v620 = vrsqrt.pop %v604
      %v621 = vrsqrt.pop %v605
      %v622 = vrsqrt.pop %v606
      %v623 = vrsqrt.pop %v607
      %v624 = vrsqrt.pop %v608
      %v625 = vrsqrt.pop %v609
      %v626 = vrsqrt.pop %v610
      %v627 = vrsqrt.pop %v611
      %v628 = vmul.f32 %v580, %v612
      %v629 = vmul.f32 %v581, %v613
      %v630 = vmul.f32 %v582, %v614
      %v631 = vmul.f32 %v583, %v615
      %v632 = vmul.f32 %v584, %v616
      %v633 = vmul.f32 %v585, %v617
      %v634 = vmul.f32 %v586, %v618
      %v635 = vmul.f32 %v587, %v619
      %v636 = vmul.f32 %v588, %v620
      %v637 = vmul.f32 %v589, %v621
      %v638 = vmul.f32 %v590, %v622
      %v639 = vmul.f32 %v591, %v623
      %v640 = vmul.f32 %v592, %v624
      %v641 = vmul.f32 %v593, %v625
      %v642 = vmul.f32 %v594, %v626
      %v643 = vmul.f32 %v595, %v627
      %v644 = vmul.f32 %v628, %v139
      %v645 = vmul.f32 %v629, %v139
      %v646 = vmul.f32 %v630, %v139
      %v647 = vmul.f32 %v631, %v139
      %v648 = vmul.f32 %v632, %v139
      %v649 = vmul.f32 %v633, %v139
      %v650 = vmul.f32 %v634, %v139
      %v651 = vmul.f32 %v635, %v139
      %v652 = vmul.f32 %v636, %v139
      %v653 = vmul.f32 %v637, %v139
      %v654 = vmul.f32 %v638, %v139
      %v655 = vmul.f32 %v639, %v139
      %v656 = vmul.f32 %v640, %v139
      %v657 = vmul.f32 %v641, %v139
      %v658 = vmul.f32 %v642, %v139
      %v659 = vmul.f32 %v643, %v139
      %v660 = vpack.c.bf16 %v645, %v644
      %v661 = vpack.c.bf16 %v647, %v646
      %v662 = vpack.c.bf16 %v649, %v648
      %v663 = vpack.c.bf16 %v651, %v650
      %v664 = vpack.c.bf16 %v653, %v652
      %v665 = vpack.c.bf16 %v655, %v654
      %v666 = vpack.c.bf16 %v657, %v656
      %v667 = vpack.c.bf16 %v659, %v658
      %668 = vmatprep.subr.bf16.mxu0 0
      %669 = vmatpush1.bf16.msra.mxu0 %v660
      %670 = vmatprep.subr.bf16.mxu0 0
      %671 = vmatpush1.bf16.msra.mxu0 %v661
      %672 = vmatprep.subr.bf16.mxu0 0
      %673 = vmatpush1.bf16.msra.mxu0 %v662
      %674 = vmatprep.subr.bf16.mxu0 0
      %675 = vmatpush1.bf16.msra.mxu0 %v663
      %676 = vmatprep.subr.bf16.mxu0 0
      %677 = vmatpush1.bf16.msra.mxu0 %v664
      %678 = vmatprep.subr.bf16.mxu0 0
      %679 = vmatpush1.bf16.msra.mxu0 %v665
      %680 = vmatprep.subr.bf16.mxu0 0
      %681 = vmatpush1.bf16.msra.mxu0 %v666
      %682 = vmatprep.subr.bf16.mxu0 0
      %683 = vmatpush1.bf16.msra.mxu0 %v667
      %684 = vmatprep.subr.bf16.mxu0 0
      %685 = vmatpush1.bf16.msra.mxu0 0
      %686 = vmatprep.subr.bf16.mxu0 0
      %687 = vmatpush1.bf16.msra.mxu0 0
      %688 = vmatprep.subr.bf16.mxu0 0
      %689 = vmatpush1.bf16.msra.mxu0 0
      %690 = vmatprep.subr.bf16.mxu0 0
      %691 = vmatpush1.bf16.msra.mxu0 0
      %692 = vmatprep.subr.bf16.mxu0 0
      %693 = vmatpush1.bf16.msra.mxu0 0
      %694 = vmatprep.subr.bf16.mxu0 0
      %695 = vmatpush1.bf16.msra.mxu0 0
      %696 = vmatprep.subr.bf16.mxu0 0
      %697 = vmatpush1.bf16.msra.mxu0 0
      %698 = vmatprep.subr.bf16.mxu0 0
      %699 = vmatpush1.bf16.msra.mxu0 0
      %700 = vmatprep.mubr.bf16.mxu0 0
      %701 = vmatmul.mubr.bf16.gmra.mrb[0].mxu0 %v265
      %v702 = vpop.f32.mrb[0].mxu0
      %v703 = vadd.f32 0.0, %v702
      %v704 = vpop.f32.mrb[0].mxu0
      %v705 = vpop.f32.mrb[0].mxu0
      %v706 = vadd.f32 0.0, %v705
      %v707 = vpop.f32.mrb[0].mxu0
      %708 = vdwg.mxu0
      %v709 = vld [vmem:[%s5] sm:$0xff]
      %v710 = vld [vmem:[%s5 + $0x8] sm:$0xff]
      %712 = vset.pattern.permute.xlu0 0
      %713 = vperm.xlu0 %712, %v709
      %v714 = vpop.permute.xlu0 %713
      %717 = vset.pattern.permute.xlu0 0
      %718 = vperm.xlu0 %717, %v710
      %v719 = vpop.permute.xlu0 %718
      %v721 = vmul.f32 %v714, %v703
      %v722 = vmul.f32 %v719, %v706
      %v723 = vpack.c.bf16 %v722, %v721
      %v740 = vunpack.c.l.b16 %v99
      %v741 = vunpack.c.l.b16 %v100
      %v742 = vunpack.c.l.b16 %v101
      %v743 = vunpack.c.l.b16 %v102
      %v744 = vunpack.c.l.b16 %v103
      %v745 = vunpack.c.l.b16 %v104
      %v746 = vunpack.c.l.b16 %v105
      %v747 = vunpack.c.l.b16 %v106
      %v748 = vunpack.c.l.b16 %v107
      %v749 = vunpack.c.l.b16 %v108
      %v750 = vunpack.c.l.b16 %v109
      %v751 = vunpack.c.l.b16 %v110
      %v752 = vunpack.c.l.b16 %v111
      %v753 = vunpack.c.l.b16 %v112
      %v754 = vunpack.c.l.b16 %v113
      %v755 = vunpack.c.l.b16 %v114
      %v756 = vpack.c.b16 %v741, %v740
      %v757 = vpack.c.b16 %v743, %v742
      %v758 = vpack.c.b16 %v745, %v744
      %v759 = vpack.c.b16 %v747, %v746
      %v760 = vpack.c.b16 %v749, %v748
      %v761 = vpack.c.b16 %v751, %v750
      %v762 = vpack.c.b16 %v753, %v752
      %v763 = vpack.c.b16 %v755, %v754
      %772 = vmatprep.subr.bf16.mxu0 0
      %773 = vmatpush1.bf16.msra.mxu0 %v756
      %774 = vmatprep.subr.bf16.mxu0 0
      %775 = vmatpush1.bf16.msra.mxu0 %v757
      %776 = vmatprep.subr.bf16.mxu0 0
      %777 = vmatpush1.bf16.msra.mxu0 %v758
      %778 = vmatprep.subr.bf16.mxu0 0
      %779 = vmatpush1.bf16.msra.mxu0 %v759
      %780 = vmatprep.subr.bf16.mxu0 0
      %781 = vmatpush1.bf16.msra.mxu0 %v760
      %782 = vmatprep.subr.bf16.mxu0 0
      %783 = vmatpush1.bf16.msra.mxu0 %v761
      %784 = vmatprep.subr.bf16.mxu0 0
      %785 = vmatpush1.bf16.msra.mxu0 %v762
      %786 = vmatprep.subr.bf16.mxu0 0
      %787 = vmatpush1.bf16.msra.mxu0 %v763
      %788 = vmatprep.subr.bf16.mxu0 0
      %789 = vmatpush1.bf16.msra.mxu0 0
      %790 = vmatprep.subr.bf16.mxu0 0
      %791 = vmatpush1.bf16.msra.mxu0 0
      %792 = vmatprep.subr.bf16.mxu0 0
      %793 = vmatpush1.bf16.msra.mxu0 0
      %794 = vmatprep.subr.bf16.mxu0 0
      %795 = vmatpush1.bf16.msra.mxu0 0
      %796 = vmatprep.subr.bf16.mxu0 0
      %797 = vmatpush1.bf16.msra.mxu0 0
      %798 = vmatprep.subr.bf16.mxu0 0
      %799 = vmatpush1.bf16.msra.mxu0 0
      %800 = vmatprep.subr.bf16.mxu0 0
      %801 = vmatpush1.bf16.msra.mxu0 0
      %802 = vmatprep.subr.bf16.mxu0 0
      %803 = vmatpush1.bf16.msra.mxu0 0
      %804 = vmatprep.mubr.bf16.mxu0 0
      %805 = vmatmul.mubr.bf16.gmra.mrb[0].mxu0 %v723
      %v806 = vpop.f32.mrb[0].mxu0
      %v807 = vadd.f32 0.0, %v806
      %v808 = vpop.f32.mrb[0].mxu0
      %v809 = vpop.f32.mrb[0].mxu0
      %v810 = vadd.f32 0.0, %v809
      %v811 = vpop.f32.mrb[0].mxu0
      %812 = vdwg.mxu0
      %v813 = vadd.f32 %v146, %v807
      %v814 = vadd.f32 %v147, %v810
      %v815 = vmul.f32 %v813, 0.5
      %v816 = vmul.f32 %v814, 0.5
      %v817 = vsub.f32 %v146, %v815
      %v818 = vsub.f32 %v147, %v816
      %v819 = vpack.c.bf16 %v818, %v817
      %s820 = scalar_lea.vmem [#allocation2], 16
      %v821 = vld [vmem:[%s820] sm:$0xff]
      %v822 = vld [vmem:[%s820 + $0x8] sm:$0xff]
      %v839 = vunpack.c.l.b16 %v83
      %v840 = vunpack.c.l.b16 %v84
      %v841 = vunpack.c.l.b16 %v85
      %v842 = vunpack.c.l.b16 %v86
      %v843 = vunpack.c.l.b16 %v87
      %v844 = vunpack.c.l.b16 %v88
      %v845 = vunpack.c.l.b16 %v89
      %v846 = vunpack.c.l.b16 %v90
      %v847 = vunpack.c.l.b16 %v91
      %v848 = vunpack.c.l.b16 %v92
      %v849 = vunpack.c.l.b16 %v93
      %v850 = vunpack.c.l.b16 %v94
      %v851 = vunpack.c.l.b16 %v95
      %v852 = vunpack.c.l.b16 %v96
      %v853 = vunpack.c.l.b16 %v97
      %v854 = vunpack.c.l.b16 %v98
      %v855 = vpack.c.b16 %v840, %v839
      %v856 = vpack.c.b16 %v842, %v841
      %v857 = vpack.c.b16 %v844, %v843
      %v858 = vpack.c.b16 %v846, %v845
      %v859 = vpack.c.b16 %v848, %v847
      %v860 = vpack.c.b16 %v850, %v849
      %v861 = vpack.c.b16 %v852, %v851
      %v862 = vpack.c.b16 %v854, %v853
      %871 = vmatprep.subr.bf16.mxu0 0
      %872 = vmatpush1.bf16.msra.mxu0 %v855
      %873 = vmatprep.subr.bf16.mxu0 0
      %874 = vmatpush1.bf16.msra.mxu0 %v856
      %875 = vmatprep.subr.bf16.mxu0 0
      %876 = vmatpush1.bf16.msra.mxu0 %v857
      %877 = vmatprep.subr.bf16.mxu0 0
      %878 = vmatpush1.bf16.msra.mxu0 %v858
      %879 = vmatprep.subr.bf16.mxu0 0
      %880 = vmatpush1.bf16.msra.mxu0 %v859
      %881 = vmatprep.subr.bf16.mxu0 0
      %882 = vmatpush1.bf16.msra.mxu0 %v860
      %883 = vmatprep.subr.bf16.mxu0 0
      %884 = vmatpush1.bf16.msra.mxu0 %v861
      %885 = vmatprep.subr.bf16.mxu0 0
      %886 = vmatpush1.bf16.msra.mxu0 %v862
      %887 = vmatprep.subr.bf16.mxu0 0
      %888 = vmatpush1.bf16.msra.mxu0 0
      %889 = vmatprep.subr.bf16.mxu0 0
      %890 = vmatpush1.bf16.msra.mxu0 0
      %891 = vmatprep.subr.bf16.mxu0 0
      %892 = vmatpush1.bf16.msra.mxu0 0
      %893 = vmatprep.subr.bf16.mxu0 0
      %894 = vmatpush1.bf16.msra.mxu0 0
      %895 = vmatprep.subr.bf16.mxu0 0
      %896 = vmatpush1.bf16.msra.mxu0 0
      %897 = vmatprep.subr.bf16.mxu0 0
      %898 = vmatpush1.bf16.msra.mxu0 0
      %899 = vmatprep.subr.bf16.mxu0 0
      %900 = vmatpush1.bf16.msra.mxu0 0
      %901 = vmatprep.subr.bf16.mxu0 0
      %902 = vmatpush1.bf16.msra.mxu0 0
      %903 = vmatprep.mubr.bf16.mxu0 0
      %904 = vmatmul.mubr.bf16.gmra.mrb[0].mxu0 %v819
      %v905 = vpop.f32.mrb[0].mxu0
      %v906 = vadd.f32 %v821, %v905
      %v907 = vpop.f32.mrb[0].mxu0
      %v908 = vpop.f32.mrb[0].mxu0
      %v909 = vadd.f32 %v822, %v908
      %v910 = vpop.f32.mrb[0].mxu0
      %911 = vdwg.mxu0
      %v912 = vpack.c.bf16 %v909, %v906
      %913 = vmatprep.subr.bf16.mxu0 0
      %914 = vmatpush1.bf16.msra.mxu0 %v912
      %915 = vmatprep.subr.bf16.mxu0 0
      %916 = vmatpush1.bf16.msra.mxu0 0
      %917 = vmatprep.subr.bf16.mxu0 0
      %918 = vmatpush1.bf16.msra.mxu0 0
      %919 = vmatprep.subr.bf16.mxu0 0
      %920 = vmatpush1.bf16.msra.mxu0 0
      %921 = vmatprep.subr.bf16.mxu0 0
      %922 = vmatpush1.bf16.msra.mxu0 0
      %923 = vmatprep.subr.bf16.mxu0 0
      %924 = vmatpush1.bf16.msra.mxu0 0
      %925 = vmatprep.subr.bf16.mxu0 0
      %926 = vmatpush1.bf16.msra.mxu0 0
      %927 = vmatprep.subr.bf16.mxu0 0
      %928 = vmatpush1.bf16.msra.mxu0 0
      %929 = vmatprep.subr.bf16.mxu0 0
      %930 = vmatpush1.bf16.msra.mxu0 0
      %931 = vmatprep.subr.bf16.mxu0 0
      %932 = vmatpush1.bf16.msra.mxu0 0
      %933 = vmatprep.subr.bf16.mxu0 0
      %934 = vmatpush1.bf16.msra.mxu0 0
      %935 = vmatprep.subr.bf16.mxu0 0
      %936 = vmatpush1.bf16.msra.mxu0 0
      %937 = vmatprep.subr.bf16.mxu0 0
      %938 = vmatpush1.bf16.msra.mxu0 0
      %939 = vmatprep.subr.bf16.mxu0 0
      %940 = vmatpush1.bf16.msra.mxu0 0
      %941 = vmatprep.subr.bf16.mxu0 0
      %942 = vmatpush1.bf16.msra.mxu0 0
      %943 = vmatprep.subr.bf16.mxu0 0
      %944 = vmatpush1.bf16.msra.mxu0 0
      %945 = vmatprep.mubr.bf16.mxu0 0
      %946 = vmatmul.mubr.bf16.gmra.mrb[0].mxu0 %v284
      %v947 = vpop.f32.mrb[0].mxu0
      %v948 = vadd.f32 0.0, %v947
      %v949 = vpop.f32.mrb[0].mxu0
      %v950 = vpop.f32.mrb[0].mxu0
      %v951 = vadd.f32 0.0, %v950
      %v952 = vpop.f32.mrb[0].mxu0
      %953 = vmatprep.mubr.bf16.mxu0 0
      %954 = vmatmul.mubr.bf16.gmra.mrb[0].mxu0 %v287
      %v955 = vpop.f32.mrb[0].mxu0
      %v956 = vadd.f32 0.0, %v955
      %v957 = vpop.f32.mrb[0].mxu0
      %v958 = vpop.f32.mrb[0].mxu0
      %v959 = vadd.f32 0.0, %v958
      %v960 = vpop.f32.mrb[0].mxu0
      %961 = vmatprep.mubr.bf16.mxu0 0
      %962 = vmatmul.mubr.bf16.gmra.mrb[0].mxu0 %v290
      %v963 = vpop.f32.mrb[0].mxu0
      %v964 = vadd.f32 0.0, %v963
      %v965 = vpop.f32.mrb[0].mxu0
      %v966 = vpop.f32.mrb[0].mxu0
      %v967 = vadd.f32 0.0, %v966
      %v968 = vpop.f32.mrb[0].mxu0
      %969 = vmatprep.mubr.bf16.mxu0 0
      %970 = vmatmul.mubr.bf16.gmra.mrb[0].mxu0 %v293
      %v971 = vpop.f32.mrb[0].mxu0
      %v972 = vadd.f32 0.0, %v971
      %v973 = vpop.f32.mrb[0].mxu0
      %v974 = vpop.f32.mrb[0].mxu0
      %v975 = vadd.f32 0.0, %v974
      %v976 = vpop.f32.mrb[0].mxu0
      %977 = vmatprep.mubr.bf16.mxu0 0
      %978 = vmatmul.mubr.bf16.gmra.mrb[0].mxu0 %v296
      %v979 = vpop.f32.mrb[0].mxu0
      %v980 = vadd.f32 0.0, %v979
      %v981 = vpop.f32.mrb[0].mxu0
      %v982 = vpop.f32.mrb[0].mxu0
      %v983 = vadd.f32 0.0, %v982
      %v984 = vpop.f32.mrb[0].mxu0
      %985 = vmatprep.mubr.bf16.mxu0 0
      %986 = vmatmul.mubr.bf16.gmra.mrb[0].mxu0 %v299
      %v987 = vpop.f32.mrb[0].mxu0
      %v988 = vadd.f32 0.0, %v987
      %v989 = vpop.f32.mrb[0].mxu0
      %v990 = vpop.f32.mrb[0].mxu0
      %v991 = vadd.f32 0.0, %v990
      %v992 = vpop.f32.mrb[0].mxu0
      %993 = vmatprep.mubr.bf16.mxu0 0
      %994 = vmatmul.mubr.bf16.gmra.mrb[0].mxu0 %v302
      %v995 = vpop.f32.mrb[0].mxu0
      %v996 = vadd.f32 0.0, %v995
      %v997 = vpop.f32.mrb[0].mxu0
      %v998 = vpop.f32.mrb[0].mxu0
      %v999 = vadd.f32 0.0, %v998
      %v1000 = vpop.f32.mrb[0].mxu0
      %1001 = vmatprep.mubr.bf16.mxu0 0
      %1002 = vmatmul.mubr.bf16.gmra.mrb[0].mxu0 %v305
      %v1003 = vpop.f32.mrb[0].mxu0
      %v1004 = vadd.f32 0.0, %v1003
      %v1005 = vpop.f32.mrb[0].mxu0
      %v1006 = vpop.f32.mrb[0].mxu0
      %v1007 = vadd.f32 0.0, %v1006
      %v1008 = vpop.f32.mrb[0].mxu0
      %1009 = vdwg.mxu0
      %v1010 = vtanh.pop %v948
      %v1011 = vtanh.pop %v951
      %v1012 = vtanh.pop %v956
      %v1013 = vtanh.pop %v959
      %v1014 = vtanh.pop %v964
      %v1015 = vtanh.pop %v967
      %v1016 = vtanh.pop %v972
      %v1017 = vtanh.pop %v975
      %v1018 = vtanh.pop %v980
      %v1019 = vtanh.pop %v983
      %v1020 = vtanh.pop %v988
      %v1021 = vtanh.pop %v991
      %v1022 = vtanh.pop %v996
      %v1023 = vtanh.pop %v999
      %v1024 = vtanh.pop %v1004
      %v1025 = vtanh.pop %v1007
      %1026 = vadd.xlane.f32.xlu0 %v1010
      %v1027 = vpop.xlane.xlu0 %1026
      %1028 = vadd.xlane.f32.xlu0 %v1011
      %v1029 = vpop.xlane.xlu0 %1028
      %1030 = vadd.xlane.f32.xlu0 %v1012
      %v1031 = vpop.xlane.xlu0 %1030
      %1032 = vadd.xlane.f32.xlu0 %v1013
      %v1033 = vpop.xlane.xlu0 %1032
      %1034 = vadd.xlane.f32.xlu0 %v1014
      %v1035 = vpop.xlane.xlu0 %1034
      %1036 = vadd.xlane.f32.xlu0 %v1015
      %v1037 = vpop.xlane.xlu0 %1036
      %1038 = vadd.xlane.f32.xlu0 %v1016
      %v1039 = vpop.xlane.xlu0 %1038
      %1040 = vadd.xlane.f32.xlu0 %v1017
      %v1041 = vpop.xlane.xlu0 %1040
      %1042 = vadd.xlane.f32.xlu0 %v1018
      %v1043 = vpop.xlane.xlu0 %1042
      %1044 = vadd.xlane.f32.xlu0 %v1019
      %v1045 = vpop.xlane.xlu0 %1044
      %1046 = vadd.xlane.f32.xlu0 %v1020
      %v1047 = vpop.xlane.xlu0 %1046
      %1048 = vadd.xlane.f32.xlu0 %v1021
      %v1049 = vpop.xlane.xlu0 %1048
      %1050 = vadd.xlane.f32.xlu0 %v1022
      %v1051 = vpop.xlane.xlu0 %1050
      %1052 = vadd.xlane.f32.xlu0 %v1023
      %v1053 = vpop.xlane.xlu0 %1052
      %1054 = vadd.xlane.f32.xlu0 %v1024
      %v1055 = vpop.xlane.xlu0 %1054
      %1056 = vadd.xlane.f32.xlu0 %v1025
      %v1057 = vpop.xlane.xlu0 %1056
      %v1058 = vmul.f32 %v1027, 0.03125
      %v1059 = vmul.f32 %v1029, 0.03125
      %v1060 = vmul.f32 %v1031, 0.03125
      %v1061 = vmul.f32 %v1033, 0.03125
      %v1062 = vmul.f32 %v1035, 0.03125
      %v1063 = vmul.f32 %v1037, 0.03125
      %v1064 = vmul.f32 %v1039, 0.03125
      %v1065 = vmul.f32 %v1041, 0.03125
      %v1066 = vmul.f32 %v1043, 0.03125
      %v1067 = vmul.f32 %v1045, 0.03125
      %v1068 = vmul.f32 %v1047, 0.03125
      %v1069 = vmul.f32 %v1049, 0.03125
      %v1070 = vmul.f32 %v1051, 0.03125
      %v1071 = vmul.f32 %v1053, 0.03125
      %v1072 = vmul.f32 %v1055, 0.03125
      %v1073 = vmul.f32 %v1057, 0.03125
      %v1074 = vmul.f32 %v1010, %v1010
      %v1075 = vmul.f32 %v1011, %v1011
      %v1076 = vmul.f32 %v1012, %v1012
      %v1077 = vmul.f32 %v1013, %v1013
      %v1078 = vmul.f32 %v1014, %v1014
      %v1079 = vmul.f32 %v1015, %v1015
      %v1080 = vmul.f32 %v1016, %v1016
      %v1081 = vmul.f32 %v1017, %v1017
      %v1082 = vmul.f32 %v1018, %v1018
      %v1083 = vmul.f32 %v1019, %v1019
      %v1084 = vmul.f32 %v1020, %v1020
      %v1085 = vmul.f32 %v1021, %v1021
      %v1086 = vmul.f32 %v1022, %v1022
      %v1087 = vmul.f32 %v1023, %v1023
      %v1088 = vmul.f32 %v1024, %v1024
      %v1089 = vmul.f32 %v1025, %v1025
      %1090 = vadd.xlane.f32.xlu0 %v1074
      %v1091 = vpop.xlane.xlu0 %1090
      %1092 = vadd.xlane.f32.xlu0 %v1075
      %v1093 = vpop.xlane.xlu0 %1092
      %1094 = vadd.xlane.f32.xlu0 %v1076
      %v1095 = vpop.xlane.xlu0 %1094
      %1096 = vadd.xlane.f32.xlu0 %v1077
      %v1097 = vpop.xlane.xlu0 %1096
      %1098 = vadd.xlane.f32.xlu0 %v1078
      %v1099 = vpop.xlane.xlu0 %1098
      %1100 = vadd.xlane.f32.xlu0 %v1079
      %v1101 = vpop.xlane.xlu0 %1100
      %1102 = vadd.xlane.f32.xlu0 %v1080
      %v1103 = vpop.xlane.xlu0 %1102
      %1104 = vadd.xlane.f32.xlu0 %v1081
      %v1105 = vpop.xlane.xlu0 %1104
      %1106 = vadd.xlane.f32.xlu0 %v1082
      %v1107 = vpop.xlane.xlu0 %1106
      %1108 = vadd.xlane.f32.xlu0 %v1083
      %v1109 = vpop.xlane.xlu0 %1108
      %1110 = vadd.xlane.f32.xlu0 %v1084
      %v1111 = vpop.xlane.xlu0 %1110
      %1112 = vadd.xlane.f32.xlu0 %v1085
      %v1113 = vpop.xlane.xlu0 %1112
      %1114 = vadd.xlane.f32.xlu0 %v1086
      %v1115 = vpop.xlane.xlu0 %1114
      %1116 = vadd.xlane.f32.xlu0 %v1087
      %v1117 = vpop.xlane.xlu0 %1116
      %1118 = vadd.xlane.f32.xlu0 %v1088
      %v1119 = vpop.xlane.xlu0 %1118
      %1120 = vadd.xlane.f32.xlu0 %v1089
      %v1121 = vpop.xlane.xlu0 %1120
      %v1122 = vmul.f32 %v1091, 0.03125
      %v1123 = vmul.f32 %v1093, 0.03125
      %v1124 = vmul.f32 %v1095, 0.03125
      %v1125 = vmul.f32 %v1097, 0.03125
      %v1126 = vmul.f32 %v1099, 0.03125
      %v1127 = vmul.f32 %v1101, 0.03125
      %v1128 = vmul.f32 %v1103, 0.03125
      %v1129 = vmul.f32 %v1105, 0.03125
      %v1130 = vmul.f32 %v1107, 0.03125
      %v1131 = vmul.f32 %v1109, 0.03125
      %v1132 = vmul.f32 %v1111, 0.03125
      %v1133 = vmul.f32 %v1113, 0.03125
      %v1134 = vmul.f32 %v1115, 0.03125
      %v1135 = vmul.f32 %v1117, 0.03125
      %v1136 = vmul.f32 %v1119, 0.03125
      %v1137 = vmul.f32 %v1121, 0.03125
      %v1138 = vmul.f32 %v1058, %v1058
      %v1139 = vmul.f32 %v1059, %v1059
      %v1140 = vmul.f32 %v1060, %v1060
      %v1141 = vmul.f32 %v1061, %v1061
      %v1142 = vmul.f32 %v1062, %v1062
      %v1143 = vmul.f32 %v1063, %v1063
      %v1144 = vmul.f32 %v1064, %v1064
      %v1145 = vmul.f32 %v1065, %v1065
      %v1146 = vmul.f32 %v1066, %v1066
      %v1147 = vmul.f32 %v1067, %v1067
      %v1148 = vmul.f32 %v1068, %v1068
      %v1149 = vmul.f32 %v1069, %v1069
      %v1150 = vmul.f32 %v1070, %v1070
      %v1151 = vmul.f32 %v1071, %v1071
      %v1152 = vmul.f32 %v1072, %v1072
      %v1153 = vmul.f32 %v1073, %v1073
      %v1154 = vsub.f32 %v1122, %v1138
      %v1155 = vsub.f32 %v1123, %v1139
      %v1156 = vsub.f32 %v1124, %v1140
      %v1157 = vsub.f32 %v1125, %v1141
      %v1158 = vsub.f32 %v1126, %v1142
      %v1159 = vsub.f32 %v1127, %v1143
      %v1160 = vsub.f32 %v1128, %v1144
      %v1161 = vsub.f32 %v1129, %v1145
      %v1162 = vsub.f32 %v1130, %v1146
      %v1163 = vsub.f32 %v1131, %v1147
      %v1164 = vsub.f32 %v1132, %v1148
      %v1165 = vsub.f32 %v1133, %v1149
      %v1166 = vsub.f32 %v1134, %v1150
      %v1167 = vsub.f32 %v1135, %v1151
      %v1168 = vsub.f32 %v1136, %v1152
      %v1169 = vsub.f32 %v1137, %v1153
      %v1170 = vmax.f32 %v1154, 0.0
      %v1171 = vmax.f32 %v1155, 0.0
      %v1172 = vmax.f32 %v1156, 0.0
      %v1173 = vmax.f32 %v1157, 0.0
      %v1174 = vmax.f32 %v1158, 0.0
      %v1175 = vmax.f32 %v1159, 0.0
      %v1176 = vmax.f32 %v1160, 0.0
      %v1177 = vmax.f32 %v1161, 0.0
      %v1178 = vmax.f32 %v1162, 0.0
      %v1179 = vmax.f32 %v1163, 0.0
      %v1180 = vmax.f32 %v1164, 0.0
      %v1181 = vmax.f32 %v1165, 0.0
      %v1182 = vmax.f32 %v1166, 0.0
      %v1183 = vmax.f32 %v1167, 0.0
      %v1184 = vmax.f32 %v1168, 0.0
      %v1185 = vmax.f32 %v1169, 0.0
      %v1186 = vsub.f32 %v1010, %v1058
      %v1187 = vsub.f32 %v1011, %v1059
      %v1188 = vsub.f32 %v1012, %v1060
      %v1189 = vsub.f32 %v1013, %v1061
      %v1190 = vsub.f32 %v1014, %v1062
      %v1191 = vsub.f32 %v1015, %v1063
      %v1192 = vsub.f32 %v1016, %v1064
      %v1193 = vsub.f32 %v1017, %v1065
      %v1194 = vsub.f32 %v1018, %v1066
      %v1195 = vsub.f32 %v1019, %v1067
      %v1196 = vsub.f32 %v1020, %v1068
      %v1197 = vsub.f32 %v1021, %v1069
      %v1198 = vsub.f32 %v1022, %v1070
      %v1199 = vsub.f32 %v1023, %v1071
      %v1200 = vsub.f32 %v1024, %v1072
      %v1201 = vsub.f32 %v1025, %v1073
      %v1202 = vadd.f32 %v1170, 1e-05
      %v1203 = vadd.f32 %v1171, 1e-05
      %v1204 = vadd.f32 %v1172, 1e-05
      %v1205 = vadd.f32 %v1173, 1e-05
      %v1206 = vadd.f32 %v1174, 1e-05
      %v1207 = vadd.f32 %v1175, 1e-05
      %v1208 = vadd.f32 %v1176, 1e-05
      %v1209 = vadd.f32 %v1177, 1e-05
      %v1210 = vadd.f32 %v1178, 1e-05
      %v1211 = vadd.f32 %v1179, 1e-05
      %v1212 = vadd.f32 %v1180, 1e-05
      %v1213 = vadd.f32 %v1181, 1e-05
      %v1214 = vadd.f32 %v1182, 1e-05
      %v1215 = vadd.f32 %v1183, 1e-05
      %v1216 = vadd.f32 %v1184, 1e-05
      %v1217 = vadd.f32 %v1185, 1e-05
      %v1218 = vrsqrt.pop %v1202
      %v1219 = vrsqrt.pop %v1203
      %v1220 = vrsqrt.pop %v1204
      %v1221 = vrsqrt.pop %v1205
      %v1222 = vrsqrt.pop %v1206
      %v1223 = vrsqrt.pop %v1207
      %v1224 = vrsqrt.pop %v1208
      %v1225 = vrsqrt.pop %v1209
      %v1226 = vrsqrt.pop %v1210
      %v1227 = vrsqrt.pop %v1211
      %v1228 = vrsqrt.pop %v1212
      %v1229 = vrsqrt.pop %v1213
      %v1230 = vrsqrt.pop %v1214
      %v1231 = vrsqrt.pop %v1215
      %v1232 = vrsqrt.pop %v1216
      %v1233 = vrsqrt.pop %v1217
      %v1234 = vmul.f32 %v1186, %v1218
      %v1235 = vmul.f32 %v1187, %v1219
      %v1236 = vmul.f32 %v1188, %v1220
      %v1237 = vmul.f32 %v1189, %v1221
      %v1238 = vmul.f32 %v1190, %v1222
      %v1239 = vmul.f32 %v1191, %v1223
      %v1240 = vmul.f32 %v1192, %v1224
      %v1241 = vmul.f32 %v1193, %v1225
      %v1242 = vmul.f32 %v1194, %v1226
      %v1243 = vmul.f32 %v1195, %v1227
      %v1244 = vmul.f32 %v1196, %v1228
      %v1245 = vmul.f32 %v1197, %v1229
      %v1246 = vmul.f32 %v1198, %v1230
      %v1247 = vmul.f32 %v1199, %v1231
      %v1248 = vmul.f32 %v1200, %v1232
      %v1249 = vmul.f32 %v1201, %v1233
      %v1250 = vmul.f32 %v1234, %v139
      %v1251 = vmul.f32 %v1235, %v139
      %v1252 = vmul.f32 %v1236, %v139
      %v1253 = vmul.f32 %v1237, %v139
      %v1254 = vmul.f32 %v1238, %v139
      %v1255 = vmul.f32 %v1239, %v139
      %v1256 = vmul.f32 %v1240, %v139
      %v1257 = vmul.f32 %v1241, %v139
      %v1258 = vmul.f32 %v1242, %v139
      %v1259 = vmul.f32 %v1243, %v139
      %v1260 = vmul.f32 %v1244, %v139
      %v1261 = vmul.f32 %v1245, %v139
      %v1262 = vmul.f32 %v1246, %v139
      %v1263 = vmul.f32 %v1247, %v139
      %v1264 = vmul.f32 %v1248, %v139
      %v1265 = vmul.f32 %v1249, %v139
      %v1266 = vpack.c.bf16 %v1251, %v1250
      %v1267 = vpack.c.bf16 %v1253, %v1252
      %v1268 = vpack.c.bf16 %v1255, %v1254
      %v1269 = vpack.c.bf16 %v1257, %v1256
      %v1270 = vpack.c.bf16 %v1259, %v1258
      %v1271 = vpack.c.bf16 %v1261, %v1260
      %v1272 = vpack.c.bf16 %v1263, %v1262
      %v1273 = vpack.c.bf16 %v1265, %v1264
      %1274 = vmatprep.subr.bf16.mxu0 0
      %1275 = vmatpush1.bf16.msra.mxu0 %v1266
      %1276 = vmatprep.subr.bf16.mxu0 0
      %1277 = vmatpush1.bf16.msra.mxu0 %v1267
      %1278 = vmatprep.subr.bf16.mxu0 0
      %1279 = vmatpush1.bf16.msra.mxu0 %v1268
      %1280 = vmatprep.subr.bf16.mxu0 0
      %1281 = vmatpush1.bf16.msra.mxu0 %v1269
      %1282 = vmatprep.subr.bf16.mxu0 0
      %1283 = vmatpush1.bf16.msra.mxu0 %v1270
      %1284 = vmatprep.subr.bf16.mxu0 0
      %1285 = vmatpush1.bf16.msra.mxu0 %v1271
      %1286 = vmatprep.subr.bf16.mxu0 0
      %1287 = vmatpush1.bf16.msra.mxu0 %v1272
      %1288 = vmatprep.subr.bf16.mxu0 0
      %1289 = vmatpush1.bf16.msra.mxu0 %v1273
      %1290 = vmatprep.subr.bf16.mxu0 0
      %1291 = vmatpush1.bf16.msra.mxu0 0
      %1292 = vmatprep.subr.bf16.mxu0 0
      %1293 = vmatpush1.bf16.msra.mxu0 0
      %1294 = vmatprep.subr.bf16.mxu0 0
      %1295 = vmatpush1.bf16.msra.mxu0 0
      %1296 = vmatprep.subr.bf16.mxu0 0
      %1297 = vmatpush1.bf16.msra.mxu0 0
      %1298 = vmatprep.subr.bf16.mxu0 0
      %1299 = vmatpush1.bf16.msra.mxu0 0
      %1300 = vmatprep.subr.bf16.mxu0 0
      %1301 = vmatpush1.bf16.msra.mxu0 0
      %1302 = vmatprep.subr.bf16.mxu0 0
      %1303 = vmatpush1.bf16.msra.mxu0 0
      %1304 = vmatprep.subr.bf16.mxu0 0
      %1305 = vmatpush1.bf16.msra.mxu0 0
      %1306 = vmatprep.mubr.bf16.mxu0 0
      %1307 = vmatmul.mubr.bf16.gmra.mrb[0].mxu0 %v265
      %v1308 = vpop.f32.mrb[0].mxu0
      %v1309 = vadd.f32 0.0, %v1308
      %v1310 = vpop.f32.mrb[0].mxu0
      %v1311 = vpop.f32.mrb[0].mxu0
      %v1312 = vadd.f32 0.0, %v1311
      %v1313 = vpop.f32.mrb[0].mxu0
      %1314 = vdwg.mxu0
      %v1315 = vmul.f32 %v714, %v1309
      %v1316 = vmul.f32 %v719, %v1312
      %v1317 = vpack.c.bf16 %v1316, %v1315
      %v1334 = vunpack.c.l.b16 %v116
      %v1335 = vunpack.c.l.b16 %v117
      %v1336 = vunpack.c.l.b16 %v118
      %v1337 = vunpack.c.l.b16 %v119
      %v1338 = vunpack.c.l.b16 %v120
      %v1339 = vunpack.c.l.b16 %v121
      %v1340 = vunpack.c.l.b16 %v122
      %v1341 = vunpack.c.l.b16 %v123
      %v1342 = vunpack.c.l.b16 %v124
      %v1343 = vunpack.c.l.b16 %v125
      %v1344 = vunpack.c.l.b16 %v126
      %v1345 = vunpack.c.l.b16 %v127
      %v1346 = vunpack.c.l.b16 %v128
      %v1347 = vunpack.c.l.b16 %v129
      %v1348 = vunpack.c.l.b16 %v130
      %v1349 = vunpack.c.l.b16 %v131
      %v1350 = vpack.c.b16 %v1335, %v1334
      %v1351 = vpack.c.b16 %v1337, %v1336
      %v1352 = vpack.c.b16 %v1339, %v1338
      %v1353 = vpack.c.b16 %v1341, %v1340
      %v1354 = vpack.c.b16 %v1343, %v1342
      %v1355 = vpack.c.b16 %v1345, %v1344
      %v1356 = vpack.c.b16 %v1347, %v1346
      %v1357 = vpack.c.b16 %v1349, %v1348
      %1366 = vmatprep.subr.bf16.mxu0 0
      %1367 = vmatpush1.bf16.msra.mxu0 %v1350
      %1368 = vmatprep.subr.bf16.mxu0 0
      %1369 = vmatpush1.bf16.msra.mxu0 %v1351
      %1370 = vmatprep.subr.bf16.mxu0 0
      %1371 = vmatpush1.bf16.msra.mxu0 %v1352
      %1372 = vmatprep.subr.bf16.mxu0 0
      %1373 = vmatpush1.bf16.msra.mxu0 %v1353
      %1374 = vmatprep.subr.bf16.mxu0 0
      %1375 = vmatpush1.bf16.msra.mxu0 %v1354
      %1376 = vmatprep.subr.bf16.mxu0 0
      %1377 = vmatpush1.bf16.msra.mxu0 %v1355
      %1378 = vmatprep.subr.bf16.mxu0 0
      %1379 = vmatpush1.bf16.msra.mxu0 %v1356
      %1380 = vmatprep.subr.bf16.mxu0 0
      %1381 = vmatpush1.bf16.msra.mxu0 %v1357
      %1382 = vmatprep.subr.bf16.mxu0 0
      %1383 = vmatpush1.bf16.msra.mxu0 0
      %1384 = vmatprep.subr.bf16.mxu0 0
      %1385 = vmatpush1.bf16.msra.mxu0 0
      %1386 = vmatprep.subr.bf16.mxu0 0
      %1387 = vmatpush1.bf16.msra.mxu0 0
      %1388 = vmatprep.subr.bf16.mxu0 0
      %1389 = vmatpush1.bf16.msra.mxu0 0
      %1390 = vmatprep.subr.bf16.mxu0 0
      %1391 = vmatpush1.bf16.msra.mxu0 0
      %1392 = vmatprep.subr.bf16.mxu0 0
      %1393 = vmatpush1.bf16.msra.mxu0 0
      %1394 = vmatprep.subr.bf16.mxu0 0
      %1395 = vmatpush1.bf16.msra.mxu0 0
      %1396 = vmatprep.subr.bf16.mxu0 0
      %1397 = vmatpush1.bf16.msra.mxu0 0
      %1398 = vmatprep.mubr.bf16.mxu0 0
      %1399 = vmatmul.mubr.bf16.gmra.mrb[0].mxu0 %v1317
      %v1400 = vpop.f32.mrb[0].mxu0
      %v1401 = vadd.f32 0.0, %v1400
      %v1402 = vpop.f32.mrb[0].mxu0
      %v1403 = vpop.f32.mrb[0].mxu0
      %v1404 = vadd.f32 0.0, %v1403
      %v1405 = vpop.f32.mrb[0].mxu0
      %1406 = vdwg.mxu0
      %v1407 = vadd.f32 %v817, %v1401
      %v1408 = vadd.f32 %v818, %v1404
      %v1409 = vmul.f32 %v1407, 0.5
      %v1410 = vmul.f32 %v1408, 0.5
      %v1411 = vsub.f32 %v817, %v1409
      %v1412 = vsub.f32 %v818, %v1410
    $region42: #{tpu_custom_call.1} parent=1 // loop_footer
      %s145 = sadd.s32 1, %s141
    $region43: #{tpu_custom_call.1} parent=1 // loop_footer_branch
      %140 = sbr.rel target = $region39
    $region44: #{tpu_custom_call.1} parent=1 // loop_exit
      _
    %1413 = vst [vmem:[#allocation8] sm:$0xff] %v146
    %1414 = vst [vmem:[#allocation8 + $0x8] sm:$0xff] %v147
    // Predicated region
    $region45: #{tpu_custom_call.1} parent=1 // pred_check
      _
    $region46: #{tpu_custom_call.1} parent=1 // pred_check_branch
      %1416 = sbr.rel (0) target = $region48
    $region47: #{tpu_custom_call.1} parent=1 // pred_region
      %s1418 = ssub.s32 256, 256
      %1419 = vsyncadd [#allocation4], %s1418
      %s1420 = sshll.u32 [#allocation8], 4
      %s1421 = int_to_ptr.vmem [resolvable:$true] %s1420
      %1426 = dma.vmem_to_hbm [thread:$0]  %s1421, 256, %s6, [#allocation4], 128, 128, 8
    $region48: #{tpu_custom_call.1} parent=1 // pred_fallthru
      _
    // Predicated region
    $region49: #{tpu_custom_call.1} parent=1 // pred_check
      _
    $region50: #{tpu_custom_call.1} parent=1 // pred_check_branch
      %1428 = sbr.rel (0) target = $region52
    $region51: #{tpu_custom_call.1} parent=1 // pred_region
      %1429 = dma.done [#allocation4], 256
    $region52: #{tpu_custom_call.1} parent=1 // pred_fallthru
      _
    %1430 = vsyncpa [#allocation3], 1
    %1431 = vsyncpa [#allocation6], 1
    %1432 = vsyncpa [#allocation4], 1

</llo_original>
